<compile_context>
chip_gen: v6e
topology: v6e:2x2x1
jax: 0.10.0
libtpu: 0.0.40
codegen_flags: <defaults>
</compile_context>

<pallas_src>
import numpy as np
import jax
import jax.numpy as jnp
from jax import lax
from jax.experimental import pallas as pl
from jax.experimental.pallas import tpu as pltpu

NIN = 64    # LSTM input size (C)
H = 16      # LSTM hidden size (= nout); bidirectional -> 2H features


def brnnin_kernel(x_ref, wih_ref, b_ref, whh_ref, wc_ref, bc_ref,
                  out_ref, gx_ref, hpair_ref):
    # x_ref:     (T, B, nin)
    # wih_ref:   (2*nin, 8H) block-diagonal paired input weights, gate-interleaved
    #            columns [i_f,i_b,f_f,f_b,g_f,g_b,o_f,o_b]; rows [x(t) | x(T-1-t)].
    #            i/f/o columns pre-scaled by 0.5 (single-tanh trick).
    # b_ref:     (1, 8H)     fused bias (b_ih + b_hh), same layout/scaling
    # whh_ref:   (2H, 8H)    block-diagonal recurrent weights (rows [h_f | h_b]),
    #            i/f/o columns pre-scaled by 0.5
    # wc_ref:    (2H, nout)  1x1-conv weights with LayerNorm gamma folded in
    # bc_ref:    (1, nout)   conv bias with LayerNorm beta folded in
    # gx_ref:    (T, B, 8H)  scratch, lane-dense (128 lanes) paired input preacts
    # hpair_ref: (T, B, 2H)  scratch, per-step [h_fwd(t=k) | h_bwd(t=T-1-k)]
    T, B, nin = x_ref.shape
    h2 = hpair_ref.shape[-1]          # 2H
    h = h2 // 2                       # H
    g8 = gx_ref.shape[-1]             # 8H (= 128 lanes)
    nout = wc_ref.shape[1]

    # ---- Paired input projection: ONE MXU matmul for both directions, with the
    # fwd/bwd time pairing baked in (no per-step select or second load later).
    x_cat = jnp.concatenate(
        [jnp.concatenate([x_ref[k], x_ref[T - 1 - k]], axis=-1) for k in range(T)],
        axis=0)                                              # (T*B, 2*nin)
    gx_ref[...] = (jnp.dot(x_cat, wih_ref[...],
                           preferred_element_type=jnp.float32)
                   + b_ref[...]).reshape(T, B, g8)

    # Hoist recurrent weights out of the loop (single load, lives in vregs).
    whh = whh_ref[...]

    # Constant lane mask for the 'g' (true-tanh) gate block, built once.
    col = lax.broadcasted_iota(jnp.int32, (1, g8), 1)
    g_mask = (col >= 4 * h) & (col < 6 * h)

    def step(k, carry):
        h_pair, c_pair = carry                               # each (B, 2H)
        # TODO(synk): matmul_push_rhs(whh) once + matmul_acc_lhs per step would
        # drop the redundant RHS push from this serial chain.
        g_pre = gx_ref[k] + jnp.dot(h_pair, whh,
                                    preferred_element_type=jnp.float32)
        # Single wide EUP push: sigmoid(z) = 0.5*tanh(z/2) + 0.5 (i/f/o columns
        # were pre-scaled by 0.5 on the host), reconstructed with one fma/select.
        act = jnp.tanh(g_pre)
        act = jnp.where(g_mask, act, 0.5 * act + 0.5)
        i_p = act[:, 0 * h2:1 * h2]
        f_p = act[:, 1 * h2:2 * h2]
        g_p = act[:, 2 * h2:3 * h2]
        o_p = act[:, 3 * h2:4 * h2]
        c_pair = f_p * c_pair + i_p * g_p
        h_pair = o_p * jnp.tanh(c_pair)
        # One contiguous (B, 2H) store per step; time-flip fixup happens later.
        hpair_ref[k] = h_pair
        return h_pair, c_pair

    zero = jnp.zeros((B, h2), jnp.float32)
    lax.fori_loop(0, T, step, (zero, zero), unroll=True)

    # ---- Epilogue (off the serial path): re-align the backward chain in time,
    # LayerNorm (affine folded into conv), 1x1 conv.
    hseq = hpair_ref[...]                                    # (T, B, 2H)
    hf = hseq[:, :, 0:h]                                     # h_fwd(t), already aligned
    hb = jnp.concatenate(
        [hseq[T - 1 - t, :, h:h2][None] for t in range(T)], axis=0)  # h_bwd(t)
    hcat = jnp.concatenate([hf, hb], axis=-1)                # (T, B, 2H)
    mu = jnp.mean(hcat, axis=-1, keepdims=True)
    var = jnp.mean((hcat - mu) ** 2, axis=-1, keepdims=True)
    hn = (hcat - mu) * lax.rsqrt(var + 1e-5)
    y = (jnp.dot(hn.reshape(T * B, h2), wc_ref[...],
                 preferred_element_type=jnp.float32) + bc_ref[...])
    out_ref[...] = y.reshape(T, B, nout)


def _interleave_gates(wf, wb, h):
    # (n, 4H) + (n, 4H), gate order [i,f,g,o] each
    # -> (n, 8H) with columns [i_f, i_b, f_f, f_b, g_f, g_b, o_f, o_b].
    n = wf.shape[0]
    return jnp.stack([wf.reshape(n, 4, h), wb.reshape(n, 4, h)],
                     axis=2).reshape(n, 8 * h)


def fuse_params(p):
    h = p["whh_f"].shape[0]
    # Block-diagonal paired input weights: rows [x(t) | x(T-1-t)].
    z_in = jnp.zeros_like(p["wih_f"])
    wih = jnp.concatenate([_interleave_gates(p["wih_f"], z_in, h),   # fwd rows
                           _interleave_gates(z_in, p["wih_b"], h)],  # bwd rows
                          axis=0)                                    # (2*nin, 8H)
    b = _interleave_gates(p["b_f"], p["b_b"], h)                     # (1, 8H)
    # Block-diagonal recurrent weights: rows [h_fwd | h_bwd].
    z_h = jnp.zeros_like(p["whh_f"])
    whh = jnp.concatenate([_interleave_gates(p["whh_f"], z_h, h),
                           _interleave_gates(z_h, p["whh_b"], h)],
                          axis=0)                                    # (2H, 8H)
    # Single-tanh trick: sigmoid(z) = 0.5*tanh(z/2) + 0.5 -> scale the i/f/o gate
    # columns (everything except the 'g' block at columns [4H, 6H)) by 0.5.
    col = jnp.arange(8 * h)
    gate_scale = jnp.where((col >= 4 * h) & (col < 6 * h), 1.0, 0.5
                           ).astype(jnp.float32)
    wih = wih * gate_scale
    whh = whh * gate_scale
    b = b * gate_scale
    # Fold LayerNorm affine into the 1x1 conv.
    wc = p["ln_g"].reshape(-1, 1) * p["wc"]                          # (2H, nout)
    bc = p["bc"] + p["ln_b"] @ p["wc"]                               # (1, nout)
    return wih, b, whh, wc, bc


def brnnin_forward(x, p):
    # x: (B, C, T) like the PyTorch module.
    # NOTE: per review, throughput improves when many sequences are batched so
    # the per-step (B, 2H) @ (2H, 8H) matmul fills >= 8 sublanes.
    B, C, T = x.shape
    xt = jnp.transpose(x, (2, 0, 1)).astype(jnp.float32)  # (T, B, nin)
    h = p["whh_f"].shape[0]
    nout = p["wc"].shape[1]
    wih, b, whh, wc, bc = fuse_params(p)

    flops = (2 * T * B * (2 * C) * 8 * h     # paired input projection (K=2*nin)
             + 2 * T * B * 2 * h * 8 * h     # recurrence
             + 2 * T * B * 2 * h * nout)     # 1x1 conv
    transcendentals = T * B * (8 * h + 2 * h)   # one wide tanh + tanh(c) per step
    bytes_accessed = 4 * (T * B * C + 2 * C * 8 * h + 2 * h * 8 * h
                          + 2 * h * nout + nout + 8 * h + T * B * nout)

    vmem = pl.BlockSpec(memory_space=pltpu.MemorySpace.VMEM)
    out = pl.pallas_call(
        brnnin_kernel,
        out_shape=jax.ShapeDtypeStruct((T, B, nout), jnp.float32),
        in_specs=[vmem] * 6,
        out_specs=vmem,
        scratch_shapes=[
            pltpu.VMEM((T, B, 8 * h), jnp.float32),  # paired gate preacts (128 lanes)
            pltpu.VMEM((T, B, 2 * h), jnp.float32),  # per-step [h_fwd | h_bwd]
        ],
        cost_estimate=pl.CostEstimate(flops=flops,
                                      transcendentals=transcendentals,
                                      bytes_accessed=bytes_accessed),
    )(xt, wih, b, whh, wc, bc)
    # TODO(synk): emit a lane-dense (B, T*nout) output from the kernel and drop
    # this transpose (extra HBM round trip) for production shapes.
    return jnp.transpose(out, (1, 0, 2))  # (B, T, nout)


def reference_forward(x, p):
    # Pure-JAX reference, identical math (for verification).
    B, C, T = x.shape
    xt = jnp.transpose(x, (2, 0, 1)).astype(jnp.float32)
    h_dim = p["whh_f"].shape[0]

    def run_dir(xs, wih, whh, b):
        def step(carry, xt_):
            h, c = carry
            g = xt_ @ wih + h @ whh + b
            i = jax.nn.sigmoid(g[:, :h_dim])
            f = jax.nn.sigmoid(g[:, h_dim:2 * h_dim])
            gg = jnp.tanh(g[:, 2 * h_dim:3 * h_dim])
            o = jax.nn.sigmoid(g[:, 3 * h_dim:])
            c = f * c + i * gg
            h = o * jnp.tanh(c)
            return (h, c), h
        zero = jnp.zeros((B, h_dim), jnp.float32)
        _, hs = lax.scan(step, (zero, zero), xs)
        return hs

    hf = run_dir(xt, p["wih_f"], p["whh_f"], p["b_f"][0])
    hb = run_dir(xt[::-1], p["wih_b"], p["whh_b"], p["b_b"][0])[::-1]
    hcat = jnp.concatenate([hf, hb], axis=-1)
    mu = jnp.mean(hcat, -1, keepdims=True)
    var = jnp.mean((hcat - mu) ** 2, -1, keepdims=True)
    hn = (hcat - mu) / jnp.sqrt(var + 1e-5) * p["ln_g"][0] + p["ln_b"][0]
    y = hn @ p["wc"] + p["bc"][0]
    return jnp.transpose(y, (1, 0, 2))


def init_params(key):
    k = 1.0 / np.sqrt(H)
    ks = jax.random.split(key, 8)
    u = lambda kk, shape: jax.random.uniform(kk, shape, jnp.float32, -k, k)
    return {
        # LSTM weights stored transposed: (nin, 4H) and (H, 4H); gate order i,f,g,o.
        "wih_f": u(ks[0], (NIN, 4 * H)),
        "whh_f": u(ks[1], (H, 4 * H)),
        "b_f":   u(ks[2], (1, 4 * H)),   # b_ih + b_hh folded into one bias
        "wih_b": u(ks[3], (NIN, 4 * H)),
        "whh_b": u(ks[4], (H, 4 * H)),
        "b_b":   u(ks[5], (1, 4 * H)),
        # LayerNorm(2H) default init: gamma=1, beta=0
        "ln_g":  jnp.ones((1, 2 * H), jnp.float32),
        "ln_b":  jnp.zeros((1, 2 * H), jnp.float32),
        # Conv1d(2H, H, kernel=1): weight (H, 2H, 1) stored as (2H, H); bias (H,)
        "wc":    u(ks[6], (2 * H, H)),
        "bc":    u(ks[7], (1, H)),
    }


if __name__ == "__main__":
    key = jax.random.PRNGKey(0)
    pkey, xkey = jax.random.split(key)
    params = init_params(pkey)

    B, T = 2, 8
    x = jax.random.normal(xkey, (B, NIN, T), jnp.float32)  # (B, C, T) like PyTorch

    y = brnnin_forward(x, params)
    y = jax.block_until_ready(y)

    y_ref = jax.block_until_ready(reference_forward(x, params))
    assert y.shape == (B, T, H), y.shape
    np.testing.assert_allclose(np.asarray(y), np.asarray(y_ref),
                               rtol=2e-3, atol=2e-3)
    print("KERNEL_OK")
</pallas_src>

<mosaic_0001>
module attributes {stable_mosaic.version = 11 : i64} {
  func.func @brnnin_kernel(%arg0: memref<8x2x64xf32, #tpu.memory_space<vmem>>, %arg1: memref<128x128xf32, #tpu.memory_space<vmem>>, %arg2: memref<1x128xf32, #tpu.memory_space<vmem>>, %arg3: memref<32x128xf32, #tpu.memory_space<vmem>>, %arg4: memref<32x16xf32, #tpu.memory_space<vmem>>, %arg5: memref<1x16xf32, #tpu.memory_space<vmem>>, %arg6: memref<8x2x16xf32, #tpu.memory_space<vmem>>, %arg7: memref<8x2x128xf32, #tpu.memory_space<vmem>>, %arg8: memref<8x2x32xf32, #tpu.memory_space<vmem>>) attributes {dimension_semantics = [], scalar_prefetch = 0 : i64, scratch_operands = 2 : i64, tpu.core_type = #tpu.core_type<tc>} {
    %c0 = arith.constant 0 : index
    %c0_0 = arith.constant 0 : index
    %c0_1 = arith.constant 0 : index
    %0 = vector.load %arg0[%c0, %c0_0, %c0_1] : memref<8x2x64xf32, #tpu.memory_space<vmem>>, vector<1x2x64xf32>
    %1 = vector.shape_cast %0 : vector<1x2x64xf32> to vector<2x64xf32>
    %c7 = arith.constant 7 : index
    %c0_2 = arith.constant 0 : index
    %c0_3 = arith.constant 0 : index
    %2 = vector.load %arg0[%c7, %c0_2, %c0_3] : memref<8x2x64xf32, #tpu.memory_space<vmem>>, vector<1x2x64xf32>
    %3 = vector.shape_cast %2 : vector<1x2x64xf32> to vector<2x64xf32>
    %4 = tpu.concatenate %1, %3 in 1 : vector<2x64xf32>, vector<2x64xf32> -> vector<2x128xf32>
    %c1 = arith.constant 1 : index
    %c0_4 = arith.constant 0 : index
    %c0_5 = arith.constant 0 : index
    %5 = vector.load %arg0[%c1, %c0_4, %c0_5] : memref<8x2x64xf32, #tpu.memory_space<vmem>>, vector<1x2x64xf32>
    %6 = vector.shape_cast %5 : vector<1x2x64xf32> to vector<2x64xf32>
    %c6 = arith.constant 6 : index
    %c0_6 = arith.constant 0 : index
    %c0_7 = arith.constant 0 : index
    %7 = vector.load %arg0[%c6, %c0_6, %c0_7] : memref<8x2x64xf32, #tpu.memory_space<vmem>>, vector<1x2x64xf32>
    %8 = vector.shape_cast %7 : vector<1x2x64xf32> to vector<2x64xf32>
    %9 = tpu.concatenate %6, %8 in 1 : vector<2x64xf32>, vector<2x64xf32> -> vector<2x128xf32>
    %c2 = arith.constant 2 : index
    %c0_8 = arith.constant 0 : index
    %c0_9 = arith.constant 0 : index
    %10 = vector.load %arg0[%c2, %c0_8, %c0_9] : memref<8x2x64xf32, #tpu.memory_space<vmem>>, vector<1x2x64xf32>
    %11 = vector.shape_cast %10 : vector<1x2x64xf32> to vector<2x64xf32>
    %c5 = arith.constant 5 : index
    %c0_10 = arith.constant 0 : index
    %c0_11 = arith.constant 0 : index
    %12 = vector.load %arg0[%c5, %c0_10, %c0_11] : memref<8x2x64xf32, #tpu.memory_space<vmem>>, vector<1x2x64xf32>
    %13 = vector.shape_cast %12 : vector<1x2x64xf32> to vector<2x64xf32>
    %14 = tpu.concatenate %11, %13 in 1 : vector<2x64xf32>, vector<2x64xf32> -> vector<2x128xf32>
    %c3 = arith.constant 3 : index
    %c0_12 = arith.constant 0 : index
    %c0_13 = arith.constant 0 : index
    %15 = vector.load %arg0[%c3, %c0_12, %c0_13] : memref<8x2x64xf32, #tpu.memory_space<vmem>>, vector<1x2x64xf32>
    %16 = vector.shape_cast %15 : vector<1x2x64xf32> to vector<2x64xf32>
    %c4 = arith.constant 4 : index
    %c0_14 = arith.constant 0 : index
    %c0_15 = arith.constant 0 : index
    %17 = vector.load %arg0[%c4, %c0_14, %c0_15] : memref<8x2x64xf32, #tpu.memory_space<vmem>>, vector<1x2x64xf32>
    %18 = vector.shape_cast %17 : vector<1x2x64xf32> to vector<2x64xf32>
    %19 = tpu.concatenate %16, %18 in 1 : vector<2x64xf32>, vector<2x64xf32> -> vector<2x128xf32>
    %c4_16 = arith.constant 4 : index
    %c0_17 = arith.constant 0 : index
    %c0_18 = arith.constant 0 : index
    %20 = vector.load %arg0[%c4_16, %c0_17, %c0_18] : memref<8x2x64xf32, #tpu.memory_space<vmem>>, vector<1x2x64xf32>
    %21 = vector.shape_cast %20 : vector<1x2x64xf32> to vector<2x64xf32>
    %c3_19 = arith.constant 3 : index
    %c0_20 = arith.constant 0 : index
    %c0_21 = arith.constant 0 : index
    %22 = vector.load %arg0[%c3_19, %c0_20, %c0_21] : memref<8x2x64xf32, #tpu.memory_space<vmem>>, vector<1x2x64xf32>
    %23 = vector.shape_cast %22 : vector<1x2x64xf32> to vector<2x64xf32>
    %24 = tpu.concatenate %21, %23 in 1 : vector<2x64xf32>, vector<2x64xf32> -> vector<2x128xf32>
    %c5_22 = arith.constant 5 : index
    %c0_23 = arith.constant 0 : index
    %c0_24 = arith.constant 0 : index
    %25 = vector.load %arg0[%c5_22, %c0_23, %c0_24] : memref<8x2x64xf32, #tpu.memory_space<vmem>>, vector<1x2x64xf32>
    %26 = vector.shape_cast %25 : vector<1x2x64xf32> to vector<2x64xf32>
    %c2_25 = arith.constant 2 : index
    %c0_26 = arith.constant 0 : index
    %c0_27 = arith.constant 0 : index
    %27 = vector.load %arg0[%c2_25, %c0_26, %c0_27] : memref<8x2x64xf32, #tpu.memory_space<vmem>>, vector<1x2x64xf32>
    %28 = vector.shape_cast %27 : vector<1x2x64xf32> to vector<2x64xf32>
    %29 = tpu.concatenate %26, %28 in 1 : vector<2x64xf32>, vector<2x64xf32> -> vector<2x128xf32>
    %c6_28 = arith.constant 6 : index
    %c0_29 = arith.constant 0 : index
    %c0_30 = arith.constant 0 : index
    %30 = vector.load %arg0[%c6_28, %c0_29, %c0_30] : memref<8x2x64xf32, #tpu.memory_space<vmem>>, vector<1x2x64xf32>
    %31 = vector.shape_cast %30 : vector<1x2x64xf32> to vector<2x64xf32>
    %c1_31 = arith.constant 1 : index
    %c0_32 = arith.constant 0 : index
    %c0_33 = arith.constant 0 : index
    %32 = vector.load %arg0[%c1_31, %c0_32, %c0_33] : memref<8x2x64xf32, #tpu.memory_space<vmem>>, vector<1x2x64xf32>
    %33 = vector.shape_cast %32 : vector<1x2x64xf32> to vector<2x64xf32>
    %34 = tpu.concatenate %31, %33 in 1 : vector<2x64xf32>, vector<2x64xf32> -> vector<2x128xf32>
    %c7_34 = arith.constant 7 : index
    %c0_35 = arith.constant 0 : index
    %c0_36 = arith.constant 0 : index
    %35 = vector.load %arg0[%c7_34, %c0_35, %c0_36] : memref<8x2x64xf32, #tpu.memory_space<vmem>>, vector<1x2x64xf32>
    %36 = vector.shape_cast %35 : vector<1x2x64xf32> to vector<2x64xf32>
    %c0_37 = arith.constant 0 : index
    %c0_38 = arith.constant 0 : index
    %c0_39 = arith.constant 0 : index
    %37 = vector.load %arg0[%c0_37, %c0_38, %c0_39] : memref<8x2x64xf32, #tpu.memory_space<vmem>>, vector<1x2x64xf32>
    %38 = vector.shape_cast %37 : vector<1x2x64xf32> to vector<2x64xf32>
    %39 = tpu.concatenate %36, %38 in 1 : vector<2x64xf32>, vector<2x64xf32> -> vector<2x128xf32>
    %40 = tpu.concatenate %4, %9, %14, %19, %24, %29, %34, %39 in 0 : vector<2x128xf32>, vector<2x128xf32>, vector<2x128xf32>, vector<2x128xf32>, vector<2x128xf32>, vector<2x128xf32>, vector<2x128xf32>, vector<2x128xf32> -> vector<16x128xf32>
    %c0_40 = arith.constant 0 : index
    %c0_41 = arith.constant 0 : index
    %41 = vector.load %arg1[%c0_40, %c0_41] : memref<128x128xf32, #tpu.memory_space<vmem>>, vector<128x128xf32>
    %cst = arith.constant dense<0.000000e+00> : vector<16x128xf32>
    %42 = tpu.matmul %40, %41, %cst {dimension_numbers = #tpu.dot_dimension_numbers<[1], [0], [0], [1], [0, 0, 1, 1], [], []>} : vector<16x128xf32>, vector<128x128xf32>, vector<16x128xf32> -> vector<16x128xf32>
    %c0_42 = arith.constant 0 : index
    %c0_43 = arith.constant 0 : index
    %43 = vector.load %arg2[%c0_42, %c0_43] : memref<1x128xf32, #tpu.memory_space<vmem>>, vector<1x128xf32>
    %44 = vector.broadcast %43 : vector<1x128xf32> to vector<16x128xf32>
    %45 = arith.addf %42, %44 : vector<16x128xf32>
    %46 = vector.shape_cast %45 : vector<16x128xf32> to vector<8x2x128xf32>
    %c0_44 = arith.constant 0 : index
    %c0_45 = arith.constant 0 : index
    %c0_46 = arith.constant 0 : index
    %47 = vector.load %arg7[%c0_44, %c0_45, %c0_46] : memref<8x2x128xf32, #tpu.memory_space<vmem>>, vector<8x2x128xf32>
    tpu.vector_store %arg7[%c0_44, %c0_45, %c0_46], %46 {strides = array<i32>} : memref<8x2x128xf32, #tpu.memory_space<vmem>>, vector<8x2x128xf32>,
    %c0_47 = arith.constant 0 : index
    %c0_48 = arith.constant 0 : index
    %48 = vector.load %arg3[%c0_47, %c0_48] : memref<32x128xf32, #tpu.memory_space<vmem>>, vector<32x128xf32>
    %49 = tpu.iota {dimensions = array<i32: 1>} : vector<1x128xi32>
    %c64_i32 = arith.constant 64 : i32
    %50 = vector.broadcast %c64_i32 : i32 to vector<1x128xi32>
    %51 = arith.cmpi sge, %49, %50 : vector<1x128xi32>
    %c96_i32 = arith.constant 96 : i32
    %52 = vector.broadcast %c96_i32 : i32 to vector<1x128xi32>
    %53 = arith.cmpi slt, %49, %52 : vector<1x128xi32>
    %54 = arith.andi %51, %53 : vector<1x128xi1>
    %cst_49 = arith.constant 0.000000e+00 : f32
    %55 = vector.broadcast %cst_49 : f32 to vector<2x32xf32>
    %c0_i32 = arith.constant 0 : i32
    %56 = arith.index_cast %c0_i32 : i32 to index
    %c0_50 = arith.constant 0 : index
    %c0_51 = arith.constant 0 : index
    %57 = vector.load %arg7[%56, %c0_50, %c0_51] : memref<8x2x128xf32, #tpu.memory_space<vmem>>, vector<1x2x128xf32>
    %58 = vector.shape_cast %57 : vector<1x2x128xf32> to vector<2x128xf32>
    %cst_52 = arith.constant dense<0.000000e+00> : vector<2x128xf32>
    %59 = tpu.matmul %55, %48, %cst_52 {dimension_numbers = #tpu.dot_dimension_numbers<[1], [0], [0], [1], [0, 0, 1, 1], [], []>} : vector<2x32xf32>, vector<32x128xf32>, vector<2x128xf32> -> vector<2x128xf32>
    %60 = arith.addf %58, %59 : vector<2x128xf32>
    %61 = math.tanh %60 : vector<2x128xf32>
    %cst_53 = arith.constant 5.000000e-01 : f32
    %62 = vector.broadcast %cst_53 : f32 to vector<2x128xf32>
    %63 = arith.mulf %62, %61 : vector<2x128xf32>
    %cst_54 = arith.constant 5.000000e-01 : f32
    %64 = vector.broadcast %cst_54 : f32 to vector<2x128xf32>
    %65 = arith.addf %63, %64 : vector<2x128xf32>
    %66 = vector.shape_cast %54 : vector<1x128xi1> to vector<1x128xi1>
    %67 = vector.broadcast %66 : vector<1x128xi1> to vector<2x128xi1>
    %68 = arith.select %67, %61, %65 : vector<2x128xi1>, vector<2x128xf32>
    %69 = vector.extract_strided_slice %68 {offsets = [0, 0], sizes = [2, 32], strides = [1, 1]} : vector<2x128xf32> to vector<2x32xf32>
    %70 = vector.extract_strided_slice %68 {offsets = [0, 32], sizes = [2, 32], strides = [1, 1]} : vector<2x128xf32> to vector<2x32xf32>
    %71 = vector.extract_strided_slice %68 {offsets = [0, 64], sizes = [2, 32], strides = [1, 1]} : vector<2x128xf32> to vector<2x32xf32>
    %72 = vector.extract_strided_slice %68 {offsets = [0, 96], sizes = [2, 32], strides = [1, 1]} : vector<2x128xf32> to vector<2x32xf32>
    %73 = arith.mulf %70, %55 : vector<2x32xf32>
    %74 = arith.mulf %69, %71 : vector<2x32xf32>
    %75 = arith.addf %73, %74 : vector<2x32xf32>
    %76 = math.tanh %75 : vector<2x32xf32>
    %77 = arith.mulf %72, %76 : vector<2x32xf32>
    %78 = arith.index_cast %c0_i32 : i32 to index
    %c0_55 = arith.constant 0 : index
    %c0_56 = arith.constant 0 : index
    %79 = vector.load %arg8[%78, %c0_55, %c0_56] : memref<8x2x32xf32, #tpu.memory_space<vmem>>, vector<1x2x32xf32>
    %80 = vector.shape_cast %79 : vector<1x2x32xf32> to vector<2x32xf32>
    %81 = vector.shape_cast %77 : vector<2x32xf32> to vector<1x2x32xf32>
    tpu.vector_store %arg8[%78, %c0_55, %c0_56], %81 {strides = array<i32>} : memref<8x2x32xf32, #tpu.memory_space<vmem>>, vector<1x2x32xf32>,
    %c1_i32 = arith.constant 1 : i32
    %82 = arith.index_cast %c1_i32 : i32 to index
    %c0_57 = arith.constant 0 : index
    %c0_58 = arith.constant 0 : index
    %83 = vector.load %arg7[%82, %c0_57, %c0_58] : memref<8x2x128xf32, #tpu.memory_space<vmem>>, vector<1x2x128xf32>
    %84 = vector.shape_cast %83 : vector<1x2x128xf32> to vector<2x128xf32>
    %cst_59 = arith.constant dense<0.000000e+00> : vector<2x128xf32>
    %85 = tpu.matmul %77, %48, %cst_59 {dimension_numbers = #tpu.dot_dimension_numbers<[1], [0], [0], [1], [0, 0, 1, 1], [], []>} : vector<2x32xf32>, vector<32x128xf32>, vector<2x128xf32> -> vector<2x128xf32>
    %86 = arith.addf %84, %85 : vector<2x128xf32>
    %87 = math.tanh %86 : vector<2x128xf32>
    %cst_60 = arith.constant 5.000000e-01 : f32
    %88 = vector.broadcast %cst_60 : f32 to vector<2x128xf32>
    %89 = arith.mulf %88, %87 : vector<2x128xf32>
    %cst_61 = arith.constant 5.000000e-01 : f32
    %90 = vector.broadcast %cst_61 : f32 to vector<2x128xf32>
    %91 = arith.addf %89, %90 : vector<2x128xf32>
    %92 = vector.shape_cast %54 : vector<1x128xi1> to vector<1x128xi1>
    %93 = vector.broadcast %92 : vector<1x128xi1> to vector<2x128xi1>
    %94 = arith.select %93, %87, %91 : vector<2x128xi1>, vector<2x128xf32>
    %95 = vector.extract_strided_slice %94 {offsets = [0, 0], sizes = [2, 32], strides = [1, 1]} : vector<2x128xf32> to vector<2x32xf32>
    %96 = vector.extract_strided_slice %94 {offsets = [0, 32], sizes = [2, 32], strides = [1, 1]} : vector<2x128xf32> to vector<2x32xf32>
    %97 = vector.extract_strided_slice %94 {offsets = [0, 64], sizes = [2, 32], strides = [1, 1]} : vector<2x128xf32> to vector<2x32xf32>
    %98 = vector.extract_strided_slice %94 {offsets = [0, 96], sizes = [2, 32], strides = [1, 1]} : vector<2x128xf32> to vector<2x32xf32>
    %99 = arith.mulf %96, %75 : vector<2x32xf32>
    %100 = arith.mulf %95, %97 : vector<2x32xf32>
    %101 = arith.addf %99, %100 : vector<2x32xf32>
    %102 = math.tanh %101 : vector<2x32xf32>
    %103 = arith.mulf %98, %102 : vector<2x32xf32>
    %104 = arith.index_cast %c1_i32 : i32 to index
    %c0_62 = arith.constant 0 : index
    %c0_63 = arith.constant 0 : index
    %105 = vector.load %arg8[%104, %c0_62, %c0_63] : memref<8x2x32xf32, #tpu.memory_space<vmem>>, vector<1x2x32xf32>
    %106 = vector.shape_cast %105 : vector<1x2x32xf32> to vector<2x32xf32>
    %107 = vector.shape_cast %103 : vector<2x32xf32> to vector<1x2x32xf32>
    tpu.vector_store %arg8[%104, %c0_62, %c0_63], %107 {strides = array<i32>} : memref<8x2x32xf32, #tpu.memory_space<vmem>>, vector<1x2x32xf32>,
    %c2_i32 = arith.constant 2 : i32
    %108 = arith.index_cast %c2_i32 : i32 to index
    %c0_64 = arith.constant 0 : index
    %c0_65 = arith.constant 0 : index
    %109 = vector.load %arg7[%108, %c0_64, %c0_65] : memref<8x2x128xf32, #tpu.memory_space<vmem>>, vector<1x2x128xf32>
    %110 = vector.shape_cast %109 : vector<1x2x128xf32> to vector<2x128xf32>
    %cst_66 = arith.constant dense<0.000000e+00> : vector<2x128xf32>
    %111 = tpu.matmul %103, %48, %cst_66 {dimension_numbers = #tpu.dot_dimension_numbers<[1], [0], [0], [1], [0, 0, 1, 1], [], []>} : vector<2x32xf32>, vector<32x128xf32>, vector<2x128xf32> -> vector<2x128xf32>
    %112 = arith.addf %110, %111 : vector<2x128xf32>
    %113 = math.tanh %112 : vector<2x128xf32>
    %cst_67 = arith.constant 5.000000e-01 : f32
    %114 = vector.broadcast %cst_67 : f32 to vector<2x128xf32>
    %115 = arith.mulf %114, %113 : vector<2x128xf32>
    %cst_68 = arith.constant 5.000000e-01 : f32
    %116 = vector.broadcast %cst_68 : f32 to vector<2x128xf32>
    %117 = arith.addf %115, %116 : vector<2x128xf32>
    %118 = vector.shape_cast %54 : vector<1x128xi1> to vector<1x128xi1>
    %119 = vector.broadcast %118 : vector<1x128xi1> to vector<2x128xi1>
    %120 = arith.select %119, %113, %117 : vector<2x128xi1>, vector<2x128xf32>
    %121 = vector.extract_strided_slice %120 {offsets = [0, 0], sizes = [2, 32], strides = [1, 1]} : vector<2x128xf32> to vector<2x32xf32>
    %122 = vector.extract_strided_slice %120 {offsets = [0, 32], sizes = [2, 32], strides = [1, 1]} : vector<2x128xf32> to vector<2x32xf32>
    %123 = vector.extract_strided_slice %120 {offsets = [0, 64], sizes = [2, 32], strides = [1, 1]} : vector<2x128xf32> to vector<2x32xf32>
    %124 = vector.extract_strided_slice %120 {offsets = [0, 96], sizes = [2, 32], strides = [1, 1]} : vector<2x128xf32> to vector<2x32xf32>
    %125 = arith.mulf %122, %101 : vector<2x32xf32>
    %126 = arith.mulf %121, %123 : vector<2x32xf32>
    %127 = arith.addf %125, %126 : vector<2x32xf32>
    %128 = math.tanh %127 : vector<2x32xf32>
    %129 = arith.mulf %124, %128 : vector<2x32xf32>
    %130 = arith.index_cast %c2_i32 : i32 to index
    %c0_69 = arith.constant 0 : index
    %c0_70 = arith.constant 0 : index
    %131 = vector.load %arg8[%130, %c0_69, %c0_70] : memref<8x2x32xf32, #tpu.memory_space<vmem>>, vector<1x2x32xf32>
    %132 = vector.shape_cast %131 : vector<1x2x32xf32> to vector<2x32xf32>
    %133 = vector.shape_cast %129 : vector<2x32xf32> to vector<1x2x32xf32>
    tpu.vector_store %arg8[%130, %c0_69, %c0_70], %133 {strides = array<i32>} : memref<8x2x32xf32, #tpu.memory_space<vmem>>, vector<1x2x32xf32>,
    %c3_i32 = arith.constant 3 : i32
    %134 = arith.index_cast %c3_i32 : i32 to index
    %c0_71 = arith.constant 0 : index
    %c0_72 = arith.constant 0 : index
    %135 = vector.load %arg7[%134, %c0_71, %c0_72] : memref<8x2x128xf32, #tpu.memory_space<vmem>>, vector<1x2x128xf32>
    %136 = vector.shape_cast %135 : vector<1x2x128xf32> to vector<2x128xf32>
    %cst_73 = arith.constant dense<0.000000e+00> : vector<2x128xf32>
    %137 = tpu.matmul %129, %48, %cst_73 {dimension_numbers = #tpu.dot_dimension_numbers<[1], [0], [0], [1], [0, 0, 1, 1], [], []>} : vector<2x32xf32>, vector<32x128xf32>, vector<2x128xf32> -> vector<2x128xf32>
    %138 = arith.addf %136, %137 : vector<2x128xf32>
    %139 = math.tanh %138 : vector<2x128xf32>
    %cst_74 = arith.constant 5.000000e-01 : f32
    %140 = vector.broadcast %cst_74 : f32 to vector<2x128xf32>
    %141 = arith.mulf %140, %139 : vector<2x128xf32>
    %cst_75 = arith.constant 5.000000e-01 : f32
    %142 = vector.broadcast %cst_75 : f32 to vector<2x128xf32>
    %143 = arith.addf %141, %142 : vector<2x128xf32>
    %144 = vector.shape_cast %54 : vector<1x128xi1> to vector<1x128xi1>
    %145 = vector.broadcast %144 : vector<1x128xi1> to vector<2x128xi1>
    %146 = arith.select %145, %139, %143 : vector<2x128xi1>, vector<2x128xf32>
    %147 = vector.extract_strided_slice %146 {offsets = [0, 0], sizes = [2, 32], strides = [1, 1]} : vector<2x128xf32> to vector<2x32xf32>
    %148 = vector.extract_strided_slice %146 {offsets = [0, 32], sizes = [2, 32], strides = [1, 1]} : vector<2x128xf32> to vector<2x32xf32>
    %149 = vector.extract_strided_slice %146 {offsets = [0, 64], sizes = [2, 32], strides = [1, 1]} : vector<2x128xf32> to vector<2x32xf32>
    %150 = vector.extract_strided_slice %146 {offsets = [0, 96], sizes = [2, 32], strides = [1, 1]} : vector<2x128xf32> to vector<2x32xf32>
    %151 = arith.mulf %148, %127 : vector<2x32xf32>
    %152 = arith.mulf %147, %149 : vector<2x32xf32>
    %153 = arith.addf %151, %152 : vector<2x32xf32>
    %154 = math.tanh %153 : vector<2x32xf32>
    %155 = arith.mulf %150, %154 : vector<2x32xf32>
    %156 = arith.index_cast %c3_i32 : i32 to index
    %c0_76 = arith.constant 0 : index
    %c0_77 = arith.constant 0 : index
    %157 = vector.load %arg8[%156, %c0_76, %c0_77] : memref<8x2x32xf32, #tpu.memory_space<vmem>>, vector<1x2x32xf32>
    %158 = vector.shape_cast %157 : vector<1x2x32xf32> to vector<2x32xf32>
    %159 = vector.shape_cast %155 : vector<2x32xf32> to vector<1x2x32xf32>
    tpu.vector_store %arg8[%156, %c0_76, %c0_77], %159 {strides = array<i32>} : memref<8x2x32xf32, #tpu.memory_space<vmem>>, vector<1x2x32xf32>,
    %c4_i32 = arith.constant 4 : i32
    %160 = arith.index_cast %c4_i32 : i32 to index
    %c0_78 = arith.constant 0 : index
    %c0_79 = arith.constant 0 : index
    %161 = vector.load %arg7[%160, %c0_78, %c0_79] : memref<8x2x128xf32, #tpu.memory_space<vmem>>, vector<1x2x128xf32>
    %162 = vector.shape_cast %161 : vector<1x2x128xf32> to vector<2x128xf32>
    %cst_80 = arith.constant dense<0.000000e+00> : vector<2x128xf32>
    %163 = tpu.matmul %155, %48, %cst_80 {dimension_numbers = #tpu.dot_dimension_numbers<[1], [0], [0], [1], [0, 0, 1, 1], [], []>} : vector<2x32xf32>, vector<32x128xf32>, vector<2x128xf32> -> vector<2x128xf32>
    %164 = arith.addf %162, %163 : vector<2x128xf32>
    %165 = math.tanh %164 : vector<2x128xf32>
    %cst_81 = arith.constant 5.000000e-01 : f32
    %166 = vector.broadcast %cst_81 : f32 to vector<2x128xf32>
    %167 = arith.mulf %166, %165 : vector<2x128xf32>
    %cst_82 = arith.constant 5.000000e-01 : f32
    %168 = vector.broadcast %cst_82 : f32 to vector<2x128xf32>
    %169 = arith.addf %167, %168 : vector<2x128xf32>
    %170 = vector.shape_cast %54 : vector<1x128xi1> to vector<1x128xi1>
    %171 = vector.broadcast %170 : vector<1x128xi1> to vector<2x128xi1>
    %172 = arith.select %171, %165, %169 : vector<2x128xi1>, vector<2x128xf32>
    %173 = vector.extract_strided_slice %172 {offsets = [0, 0], sizes = [2, 32], strides = [1, 1]} : vector<2x128xf32> to vector<2x32xf32>
    %174 = vector.extract_strided_slice %172 {offsets = [0, 32], sizes = [2, 32], strides = [1, 1]} : vector<2x128xf32> to vector<2x32xf32>
    %175 = vector.extract_strided_slice %172 {offsets = [0, 64], sizes = [2, 32], strides = [1, 1]} : vector<2x128xf32> to vector<2x32xf32>
    %176 = vector.extract_strided_slice %172 {offsets = [0, 96], sizes = [2, 32], strides = [1, 1]} : vector<2x128xf32> to vector<2x32xf32>
    %177 = arith.mulf %174, %153 : vector<2x32xf32>
    %178 = arith.mulf %173, %175 : vector<2x32xf32>
    %179 = arith.addf %177, %178 : vector<2x32xf32>
    %180 = math.tanh %179 : vector<2x32xf32>
    %181 = arith.mulf %176, %180 : vector<2x32xf32>
    %182 = arith.index_cast %c4_i32 : i32 to index
    %c0_83 = arith.constant 0 : index
    %c0_84 = arith.constant 0 : index
    %183 = vector.load %arg8[%182, %c0_83, %c0_84] : memref<8x2x32xf32, #tpu.memory_space<vmem>>, vector<1x2x32xf32>
    %184 = vector.shape_cast %183 : vector<1x2x32xf32> to vector<2x32xf32>
    %185 = vector.shape_cast %181 : vector<2x32xf32> to vector<1x2x32xf32>
    tpu.vector_store %arg8[%182, %c0_83, %c0_84], %185 {strides = array<i32>} : memref<8x2x32xf32, #tpu.memory_space<vmem>>, vector<1x2x32xf32>,
    %c5_i32 = arith.constant 5 : i32
    %186 = arith.index_cast %c5_i32 : i32 to index
    %c0_85 = arith.constant 0 : index
    %c0_86 = arith.constant 0 : index
    %187 = vector.load %arg7[%186, %c0_85, %c0_86] : memref<8x2x128xf32, #tpu.memory_space<vmem>>, vector<1x2x128xf32>
    %188 = vector.shape_cast %187 : vector<1x2x128xf32> to vector<2x128xf32>
    %cst_87 = arith.constant dense<0.000000e+00> : vector<2x128xf32>
    %189 = tpu.matmul %181, %48, %cst_87 {dimension_numbers = #tpu.dot_dimension_numbers<[1], [0], [0], [1], [0, 0, 1, 1], [], []>} : vector<2x32xf32>, vector<32x128xf32>, vector<2x128xf32> -> vector<2x128xf32>
    %190 = arith.addf %188, %189 : vector<2x128xf32>
    %191 = math.tanh %190 : vector<2x128xf32>
    %cst_88 = arith.constant 5.000000e-01 : f32
    %192 = vector.broadcast %cst_88 : f32 to vector<2x128xf32>
    %193 = arith.mulf %192, %191 : vector<2x128xf32>
    %cst_89 = arith.constant 5.000000e-01 : f32
    %194 = vector.broadcast %cst_89 : f32 to vector<2x128xf32>
    %195 = arith.addf %193, %194 : vector<2x128xf32>
    %196 = vector.shape_cast %54 : vector<1x128xi1> to vector<1x128xi1>
    %197 = vector.broadcast %196 : vector<1x128xi1> to vector<2x128xi1>
    %198 = arith.select %197, %191, %195 : vector<2x128xi1>, vector<2x128xf32>
    %199 = vector.extract_strided_slice %198 {offsets = [0, 0], sizes = [2, 32], strides = [1, 1]} : vector<2x128xf32> to vector<2x32xf32>
    %200 = vector.extract_strided_slice %198 {offsets = [0, 32], sizes = [2, 32], strides = [1, 1]} : vector<2x128xf32> to vector<2x32xf32>
    %201 = vector.extract_strided_slice %198 {offsets = [0, 64], sizes = [2, 32], strides = [1, 1]} : vector<2x128xf32> to vector<2x32xf32>
    %202 = vector.extract_strided_slice %198 {offsets = [0, 96], sizes = [2, 32], strides = [1, 1]} : vector<2x128xf32> to vector<2x32xf32>
    %203 = arith.mulf %200, %179 : vector<2x32xf32>
    %204 = arith.mulf %199, %201 : vector<2x32xf32>
    %205 = arith.addf %203, %204 : vector<2x32xf32>
    %206 = math.tanh %205 : vector<2x32xf32>
    %207 = arith.mulf %202, %206 : vector<2x32xf32>
    %208 = arith.index_cast %c5_i32 : i32 to index
    %c0_90 = arith.constant 0 : index
    %c0_91 = arith.constant 0 : index
    %209 = vector.load %arg8[%208, %c0_90, %c0_91] : memref<8x2x32xf32, #tpu.memory_space<vmem>>, vector<1x2x32xf32>
    %210 = vector.shape_cast %209 : vector<1x2x32xf32> to vector<2x32xf32>
    %211 = vector.shape_cast %207 : vector<2x32xf32> to vector<1x2x32xf32>
    tpu.vector_store %arg8[%208, %c0_90, %c0_91], %211 {strides = array<i32>} : memref<8x2x32xf32, #tpu.memory_space<vmem>>, vector<1x2x32xf32>,
    %c6_i32 = arith.constant 6 : i32
    %212 = arith.index_cast %c6_i32 : i32 to index
    %c0_92 = arith.constant 0 : index
    %c0_93 = arith.constant 0 : index
    %213 = vector.load %arg7[%212, %c0_92, %c0_93] : memref<8x2x128xf32, #tpu.memory_space<vmem>>, vector<1x2x128xf32>
    %214 = vector.shape_cast %213 : vector<1x2x128xf32> to vector<2x128xf32>
    %cst_94 = arith.constant dense<0.000000e+00> : vector<2x128xf32>
    %215 = tpu.matmul %207, %48, %cst_94 {dimension_numbers = #tpu.dot_dimension_numbers<[1], [0], [0], [1], [0, 0, 1, 1], [], []>} : vector<2x32xf32>, vector<32x128xf32>, vector<2x128xf32> -> vector<2x128xf32>
    %216 = arith.addf %214, %215 : vector<2x128xf32>
    %217 = math.tanh %216 : vector<2x128xf32>
    %cst_95 = arith.constant 5.000000e-01 : f32
    %218 = vector.broadcast %cst_95 : f32 to vector<2x128xf32>
    %219 = arith.mulf %218, %217 : vector<2x128xf32>
    %cst_96 = arith.constant 5.000000e-01 : f32
    %220 = vector.broadcast %cst_96 : f32 to vector<2x128xf32>
    %221 = arith.addf %219, %220 : vector<2x128xf32>
    %222 = vector.shape_cast %54 : vector<1x128xi1> to vector<1x128xi1>
    %223 = vector.broadcast %222 : vector<1x128xi1> to vector<2x128xi1>
    %224 = arith.select %223, %217, %221 : vector<2x128xi1>, vector<2x128xf32>
    %225 = vector.extract_strided_slice %224 {offsets = [0, 0], sizes = [2, 32], strides = [1, 1]} : vector<2x128xf32> to vector<2x32xf32>
    %226 = vector.extract_strided_slice %224 {offsets = [0, 32], sizes = [2, 32], strides = [1, 1]} : vector<2x128xf32> to vector<2x32xf32>
    %227 = vector.extract_strided_slice %224 {offsets = [0, 64], sizes = [2, 32], strides = [1, 1]} : vector<2x128xf32> to vector<2x32xf32>
    %228 = vector.extract_strided_slice %224 {offsets = [0, 96], sizes = [2, 32], strides = [1, 1]} : vector<2x128xf32> to vector<2x32xf32>
    %229 = arith.mulf %226, %205 : vector<2x32xf32>
    %230 = arith.mulf %225, %227 : vector<2x32xf32>
    %231 = arith.addf %229, %230 : vector<2x32xf32>
    %232 = math.tanh %231 : vector<2x32xf32>
    %233 = arith.mulf %228, %232 : vector<2x32xf32>
    %234 = arith.index_cast %c6_i32 : i32 to index
    %c0_97 = arith.constant 0 : index
    %c0_98 = arith.constant 0 : index
    %235 = vector.load %arg8[%234, %c0_97, %c0_98] : memref<8x2x32xf32, #tpu.memory_space<vmem>>, vector<1x2x32xf32>
    %236 = vector.shape_cast %235 : vector<1x2x32xf32> to vector<2x32xf32>
    %237 = vector.shape_cast %233 : vector<2x32xf32> to vector<1x2x32xf32>
    tpu.vector_store %arg8[%234, %c0_97, %c0_98], %237 {strides = array<i32>} : memref<8x2x32xf32, #tpu.memory_space<vmem>>, vector<1x2x32xf32>,
    %c7_i32 = arith.constant 7 : i32
    %238 = arith.index_cast %c7_i32 : i32 to index
    %c0_99 = arith.constant 0 : index
    %c0_100 = arith.constant 0 : index
    %239 = vector.load %arg7[%238, %c0_99, %c0_100] : memref<8x2x128xf32, #tpu.memory_space<vmem>>, vector<1x2x128xf32>
    %240 = vector.shape_cast %239 : vector<1x2x128xf32> to vector<2x128xf32>
    %cst_101 = arith.constant dense<0.000000e+00> : vector<2x128xf32>
    %241 = tpu.matmul %233, %48, %cst_101 {dimension_numbers = #tpu.dot_dimension_numbers<[1], [0], [0], [1], [0, 0, 1, 1], [], []>} : vector<2x32xf32>, vector<32x128xf32>, vector<2x128xf32> -> vector<2x128xf32>
    %242 = arith.addf %240, %241 : vector<2x128xf32>
    %243 = math.tanh %242 : vector<2x128xf32>
    %cst_102 = arith.constant 5.000000e-01 : f32
    %244 = vector.broadcast %cst_102 : f32 to vector<2x128xf32>
    %245 = arith.mulf %244, %243 : vector<2x128xf32>
    %cst_103 = arith.constant 5.000000e-01 : f32
    %246 = vector.broadcast %cst_103 : f32 to vector<2x128xf32>
    %247 = arith.addf %245, %246 : vector<2x128xf32>
    %248 = vector.shape_cast %54 : vector<1x128xi1> to vector<1x128xi1>
    %249 = vector.broadcast %248 : vector<1x128xi1> to vector<2x128xi1>
    %250 = arith.select %249, %243, %247 : vector<2x128xi1>, vector<2x128xf32>
    %251 = vector.extract_strided_slice %250 {offsets = [0, 0], sizes = [2, 32], strides = [1, 1]} : vector<2x128xf32> to vector<2x32xf32>
    %252 = vector.extract_strided_slice %250 {offsets = [0, 32], sizes = [2, 32], strides = [1, 1]} : vector<2x128xf32> to vector<2x32xf32>
    %253 = vector.extract_strided_slice %250 {offsets = [0, 64], sizes = [2, 32], strides = [1, 1]} : vector<2x128xf32> to vector<2x32xf32>
    %254 = vector.extract_strided_slice %250 {offsets = [0, 96], sizes = [2, 32], strides = [1, 1]} : vector<2x128xf32> to vector<2x32xf32>
    %255 = arith.mulf %252, %231 : vector<2x32xf32>
    %256 = arith.mulf %251, %253 : vector<2x32xf32>
    %257 = arith.addf %255, %256 : vector<2x32xf32>
    %258 = math.tanh %257 : vector<2x32xf32>
    %259 = arith.mulf %254, %258 : vector<2x32xf32>
    %260 = arith.index_cast %c7_i32 : i32 to index
    %c0_104 = arith.constant 0 : index
    %c0_105 = arith.constant 0 : index
    %261 = vector.load %arg8[%260, %c0_104, %c0_105] : memref<8x2x32xf32, #tpu.memory_space<vmem>>, vector<1x2x32xf32>
    %262 = vector.shape_cast %261 : vector<1x2x32xf32> to vector<2x32xf32>
    %263 = vector.shape_cast %259 : vector<2x32xf32> to vector<1x2x32xf32>
    tpu.vector_store %arg8[%260, %c0_104, %c0_105], %263 {strides = array<i32>} : memref<8x2x32xf32, #tpu.memory_space<vmem>>, vector<1x2x32xf32>,
    %c8_i32 = arith.constant 8 : i32
    %c0_106 = arith.constant 0 : index
    %c0_107 = arith.constant 0 : index
    %c0_108 = arith.constant 0 : index
    %264 = vector.load %arg8[%c0_106, %c0_107, %c0_108] : memref<8x2x32xf32, #tpu.memory_space<vmem>>, vector<8x2x32xf32>
    %265 = vector.extract_strided_slice %264 {offsets = [0, 0, 0], sizes = [8, 2, 16], strides = [1, 1, 1]} : vector<8x2x32xf32> to vector<8x2x16xf32>
    %266 = vector.extract_strided_slice %264 {offsets = [7, 0, 16], sizes = [1, 2, 16], strides = [1, 1, 1]} : vector<8x2x32xf32> to vector<1x2x16xf32>
    %267 = vector.shape_cast %266 : vector<1x2x16xf32> to vector<2x16xf32>
    %268 = vector.shape_cast %267 : vector<2x16xf32> to vector<1x2x16xf32>
    %269 = vector.extract_strided_slice %264 {offsets = [6, 0, 16], sizes = [1, 2, 16], strides = [1, 1, 1]} : vector<8x2x32xf32> to vector<1x2x16xf32>
    %270 = vector.shape_cast %269 : vector<1x2x16xf32> to vector<2x16xf32>
    %271 = vector.shape_cast %270 : vector<2x16xf32> to vector<1x2x16xf32>
    %272 = vector.extract_strided_slice %264 {offsets = [5, 0, 16], sizes = [1, 2, 16], strides = [1, 1, 1]} : vector<8x2x32xf32> to vector<1x2x16xf32>
    %273 = vector.shape_cast %272 : vector<1x2x16xf32> to vector<2x16xf32>
    %274 = vector.shape_cast %273 : vector<2x16xf32> to vector<1x2x16xf32>
    %275 = vector.extract_strided_slice %264 {offsets = [4, 0, 16], sizes = [1, 2, 16], strides = [1, 1, 1]} : vector<8x2x32xf32> to vector<1x2x16xf32>
    %276 = vector.shape_cast %275 : vector<1x2x16xf32> to vector<2x16xf32>
    %277 = vector.shape_cast %276 : vector<2x16xf32> to vector<1x2x16xf32>
    %278 = vector.extract_strided_slice %264 {offsets = [3, 0, 16], sizes = [1, 2, 16], strides = [1, 1, 1]} : vector<8x2x32xf32> to vector<1x2x16xf32>
    %279 = vector.shape_cast %278 : vector<1x2x16xf32> to vector<2x16xf32>
    %280 = vector.shape_cast %279 : vector<2x16xf32> to vector<1x2x16xf32>
    %281 = vector.extract_strided_slice %264 {offsets = [2, 0, 16], sizes = [1, 2, 16], strides = [1, 1, 1]} : vector<8x2x32xf32> to vector<1x2x16xf32>
    %282 = vector.shape_cast %281 : vector<1x2x16xf32> to vector<2x16xf32>
    %283 = vector.shape_cast %282 : vector<2x16xf32> to vector<1x2x16xf32>
    %284 = vector.extract_strided_slice %264 {offsets = [1, 0, 16], sizes = [1, 2, 16], strides = [1, 1, 1]} : vector<8x2x32xf32> to vector<1x2x16xf32>
    %285 = vector.shape_cast %284 : vector<1x2x16xf32> to vector<2x16xf32>
    %286 = vector.shape_cast %285 : vector<2x16xf32> to vector<1x2x16xf32>
    %287 = vector.extract_strided_slice %264 {offsets = [0, 0, 16], sizes = [1, 2, 16], strides = [1, 1, 1]} : vector<8x2x32xf32> to vector<1x2x16xf32>
    %288 = vector.shape_cast %287 : vector<1x2x16xf32> to vector<2x16xf32>
    %289 = vector.shape_cast %288 : vector<2x16xf32> to vector<1x2x16xf32>
    %290 = tpu.concatenate %268, %271, %274, %277, %280, %283, %286, %289 in 0 : vector<1x2x16xf32>, vector<1x2x16xf32>, vector<1x2x16xf32>, vector<1x2x16xf32>, vector<1x2x16xf32>, vector<1x2x16xf32>, vector<1x2x16xf32>, vector<1x2x16xf32> -> vector<8x2x16xf32>
    %291 = tpu.concatenate %265, %290 in 2 : vector<8x2x16xf32>, vector<8x2x16xf32> -> vector<8x2x32xf32>
    %cst_109 = arith.constant dense<0.000000e+00> : vector<8x2xf32>
    %292 = vector.multi_reduction <add>, %291, %cst_109 [2] : vector<8x2x32xf32> to vector<8x2xf32>
    %293 = vector.shape_cast %292 : vector<8x2xf32> to vector<8x2x1xf32>
    %cst_110 = arith.constant 3.200000e+01 : f32
    %294 = vector.broadcast %cst_110 : f32 to vector<8x2x1xf32>
    %295 = arith.divf %293, %294 : vector<8x2x1xf32>
    %296 = vector.broadcast %295 : vector<8x2x1xf32> to vector<8x2x32xf32>
    %297 = arith.subf %291, %296 : vector<8x2x32xf32>
    %298 = arith.mulf %297, %297 : vector<8x2x32xf32>
    %cst_111 = arith.constant dense<0.000000e+00> : vector<8x2xf32>
    %299 = vector.multi_reduction <add>, %298, %cst_111 [2] : vector<8x2x32xf32> to vector<8x2xf32>
    %300 = vector.shape_cast %299 : vector<8x2xf32> to vector<8x2x1xf32>
    %cst_112 = arith.constant 3.200000e+01 : f32
    %301 = vector.broadcast %cst_112 : f32 to vector<8x2x1xf32>
    %302 = arith.divf %300, %301 : vector<8x2x1xf32>
    %303 = vector.broadcast %295 : vector<8x2x1xf32> to vector<8x2x32xf32>
    %304 = arith.subf %291, %303 : vector<8x2x32xf32>
    %cst_113 = arith.constant 9.99999974E-6 : f32
    %305 = vector.broadcast %cst_113 : f32 to vector<8x2x1xf32>
    %306 = arith.addf %302, %305 : vector<8x2x1xf32>
    %307 = math.rsqrt %306 : vector<8x2x1xf32>
    %308 = vector.broadcast %307 : vector<8x2x1xf32> to vector<8x2x32xf32>
    %309 = arith.mulf %304, %308 : vector<8x2x32xf32>
    %310 = vector.shape_cast %309 : vector<8x2x32xf32> to vector<16x32xf32>
    %c0_114 = arith.constant 0 : index
    %c0_115 = arith.constant 0 : index
    %311 = vector.load %arg4[%c0_114, %c0_115] : memref<32x16xf32, #tpu.memory_space<vmem>>, vector<32x16xf32>
    %cst_116 = arith.constant dense<0.000000e+00> : vector<16x16xf32>
    %312 = tpu.matmul %310, %311, %cst_116 {dimension_numbers = #tpu.dot_dimension_numbers<[1], [0], [0], [1], [0, 0, 1, 1], [], []>} : vector<16x32xf32>, vector<32x16xf32>, vector<16x16xf32> -> vector<16x16xf32>
    %c0_117 = arith.constant 0 : index
    %c0_118 = arith.constant 0 : index
    %313 = vector.load %arg5[%c0_117, %c0_118] : memref<1x16xf32, #tpu.memory_space<vmem>>, vector<1x16xf32>
    %314 = vector.broadcast %313 : vector<1x16xf32> to vector<16x16xf32>
    %315 = arith.addf %312, %314 : vector<16x16xf32>
    %316 = vector.shape_cast %315 : vector<16x16xf32> to vector<8x2x16xf32>
    %c0_119 = arith.constant 0 : index
    %c0_120 = arith.constant 0 : index
    %c0_121 = arith.constant 0 : index
    %317 = vector.load %arg6[%c0_119, %c0_120, %c0_121] : memref<8x2x16xf32, #tpu.memory_space<vmem>>, vector<8x2x16xf32>
    tpu.vector_store %arg6[%c0_119, %c0_120, %c0_121], %316 {strides = array<i32>} : memref<8x2x16xf32, #tpu.memory_space<vmem>>, vector<8x2x16xf32>,
    return
  }
}

</mosaic_0001>

<llo_original>
// kernel: tpu_custom_call.1
$region0: #{tpu_custom_call.1}
  #allocation0 [shape = 'u32[]', space=smem, size = 0x4, offset = 0x4, fixed_abs, tag = 'smem constant byte address 0x4 - core index']
  #allocation1 [shape = 'u32[144,128]{1,0:T(1,128)}', space=vmem, size = 0x12000, scoped, tag = 'internal scratch']
  #allocation2 [shape = 'f32[8,2,128]{2,1,0:T(2,128)}', space=vmem, size = 0x2000, scoped, tag = 'scratch operand']
  #allocation3 [shape = 'f32[8,2,32]{2,1,0:T(2,128)}', space=vmem, size = 0x2000, scoped, tag = 'scratch operand']
  %s0 = inlined_call_operand.vmem [shape: f32[8,2,64], index: 0, kind: input, shape index: {}]
  %s1 = inlined_call_operand.hbm [shape: f32[128,128], index: 1, kind: input, shape index: {}]
  %s2 = inlined_call_operand.vmem [shape: f32[1,128], index: 2, kind: input, shape index: {}]
  %s3 = inlined_call_operand.vmem [shape: f32[32,128], index: 3, kind: input, shape index: {}]
  %s4 = inlined_call_operand.vmem [shape: f32[32,16], index: 4, kind: input, shape index: {}]
  %s5 = inlined_call_operand.vmem [shape: f32[1,16], index: 5, kind: input, shape index: {}]
  %s6 = inlined_call_operand.hbm [shape: f32[8,2,16], index: 6, kind: output, shape index: {}]
  %s7 = sld [smem:[#allocation0]]
  $region38: #{tpu_custom_call.1} parent=0
    _
  %s9 = ssub.s32 1, %s7
  %s10 = scalar_select 0, %s9, %s7
  $region1: #{tpu_custom_call.1} parent=0
    #allocation4 [shape = 'u8[65536]{0}', space=vmem, size = 0x10000, scoped, tag = 'input window, operand 1, single buffered']
    #allocation5 [shape = 's32[1]{0}', space=sflag, size = 0x4, scoped, tag = 'scoped memory for tpu_custom_call.1']
    #allocation6 [shape = 's32[1]{0}', space=sflag, size = 0x4, scoped, tag = 'scoped memory for tpu_custom_call.1']
    #allocation7 [shape = 'u8[8192]{0}', space=vmem, size = 0x2000, scoped, tag = 'output window, operand 0, single buffered']
    %11 = vsyncpa [#allocation5], 0
    %12 = vsyncpa [#allocation6], 0
    // Predicated region
    $region2: #{tpu_custom_call.1} parent=1 // pred_check
      _
    $region3: #{tpu_custom_call.1} parent=1 // pred_check_branch
      %14 = sbr.rel (0) target = $region5
    $region4: #{tpu_custom_call.1} parent=1 // pred_region
      _
    $region5: #{tpu_custom_call.1} parent=1 // pred_fallthru
      _
    // Predicated region
    $region6: #{tpu_custom_call.1} parent=1 // pred_check
      _
    $region7: #{tpu_custom_call.1} parent=1 // pred_check_branch
      %16 = sbr.rel (0) target = $region9
    $region8: #{tpu_custom_call.1} parent=1 // pred_region
      %s18 = ssub.s32 2048, 2048
      %19 = vsyncadd [#allocation5], %s18
      %s20 = sshll.u32 [#allocation4], 4
      %s21 = int_to_ptr.vmem [resolvable:$true] %s20
      %26 = dma.hbm_to_vmem [thread:$0]  %s1, 2048, %s21, [#allocation5], 128, 128, 8
    $region9: #{tpu_custom_call.1} parent=1 // pred_fallthru
      _
    // Predicated region
    $region10: #{tpu_custom_call.1} parent=1 // pred_check
      _
    $region11: #{tpu_custom_call.1} parent=1 // pred_check_branch
      %28 = sbr.rel (0) target = $region13
    $region12: #{tpu_custom_call.1} parent=1 // pred_region
      _
    $region13: #{tpu_custom_call.1} parent=1 // pred_fallthru
      _
    // Predicated region
    $region14: #{tpu_custom_call.1} parent=1 // pred_check
      _
    $region15: #{tpu_custom_call.1} parent=1 // pred_check_branch
      %30 = sbr.rel (0) target = $region17
    $region16: #{tpu_custom_call.1} parent=1 // pred_region
      _
    $region17: #{tpu_custom_call.1} parent=1 // pred_fallthru
      _
    // Predicated region
    $region18: #{tpu_custom_call.1} parent=1 // pred_check
      _
    $region19: #{tpu_custom_call.1} parent=1 // pred_check_branch
      %32 = sbr.rel (0) target = $region21
    $region20: #{tpu_custom_call.1} parent=1 // pred_region
      _
    $region21: #{tpu_custom_call.1} parent=1 // pred_fallthru
      _
    // Predicated region
    $region22: #{tpu_custom_call.1} parent=1 // pred_check
      _
    $region23: #{tpu_custom_call.1} parent=1 // pred_check_branch
      %34 = sbr.rel (0) target = $region25
    $region24: #{tpu_custom_call.1} parent=1 // pred_region
      _
    $region25: #{tpu_custom_call.1} parent=1 // pred_fallthru
      _
    // Predicated region
    $region26: #{tpu_custom_call.1} parent=1 // pred_check
      _
    $region27: #{tpu_custom_call.1} parent=1 // pred_check_branch
      %36 = sbr.rel (0) target = $region29
    $region28: #{tpu_custom_call.1} parent=1 // pred_region
      %37 = dma.done [#allocation5], 2048
    $region29: #{tpu_custom_call.1} parent=1 // pred_fallthru
      _
    %v38 = vld [vmem:[%s0] sm:$0x3]
    %s39 = scalar_lea.vmem %s0, 14
    %v40 = vld [vmem:[%s39] sm:$0x3]
    %42 = vrot.lane.b32.xlu0 %v40, 64
    %v43 = vpop.permute.xlu0 %42
    %vm45 = vcmask 523264
    %v46 = vsel %vm45, %v38, %v43
    %s47 = scalar_lea.vmem %s0, 2
    %v48 = vld [vmem:[%s47] sm:$0x3]
    %s49 = scalar_lea.vmem %s0, 12
    %v50 = vld [vmem:[%s49] sm:$0x3]
    %52 = vrot.lane.b32.xlu0 %v50, 64
    %v53 = vpop.permute.xlu0 %52
    %v55 = vsel %vm45, %v48, %v53
    %s56 = scalar_lea.vmem %s0, 4
    %v57 = vld [vmem:[%s56] sm:$0x3]
    %s58 = scalar_lea.vmem %s0, 10
    %v59 = vld [vmem:[%s58] sm:$0x3]
    %61 = vrot.lane.b32.xlu0 %v59, 64
    %v62 = vpop.permute.xlu0 %61
    %v64 = vsel %vm45, %v57, %v62
    %s65 = scalar_lea.vmem %s0, 6
    %v66 = vld [vmem:[%s65] sm:$0x3]
    %s67 = scalar_lea.vmem %s0, 8
    %v68 = vld [vmem:[%s67] sm:$0x3]
    %70 = vrot.lane.b32.xlu0 %v68, 64
    %v71 = vpop.permute.xlu0 %70
    %v73 = vsel %vm45, %v66, %v71
    %75 = vrot.lane.b32.xlu0 %v66, 64
    %v76 = vpop.permute.xlu0 %75
    %v78 = vsel %vm45, %v68, %v76
    %80 = vrot.lane.b32.xlu0 %v57, 64
    %v81 = vpop.permute.xlu0 %80
    %v83 = vsel %vm45, %v59, %v81
    %85 = vrot.lane.b32.xlu0 %v48, 64
    %v86 = vpop.permute.xlu0 %85
    %v88 = vsel %vm45, %v50, %v86
    %90 = vrot.lane.b32.xlu0 %v38, 64
    %v91 = vpop.permute.xlu0 %90
    %v93 = vsel %vm45, %v40, %v91
    %v95 = vrot.slane %v55, 6
    %v98 = vrot.slane %v64, 4
    %v101 = vrot.slane %v73, 2
    %v104 = vrot.slane %v83, 6
    %v107 = vrot.slane %v88, 4
    %v110 = vrot.slane %v93, 2
    %vm112 = vcmask 1041408
    %v113 = vsel %vm112, %v46, %v95
    %vm114 = vcmask 1043456
    %v115 = vsel %vm114, %v113, %v98
    %vm116 = vcmask 1045504
    %v117 = vsel %vm116, %v115, %v101
    %v118 = vsel %vm112, %v78, %v104
    %v119 = vsel %vm114, %v118, %v107
    %v120 = vsel %vm116, %v119, %v110
    %v121 = vld [vmem:[#allocation4] sm:$0xff]
    %v122 = vld [vmem:[#allocation4 + $0x8] sm:$0xff]
    %v123 = vld [vmem:[#allocation4 + $0x10] sm:$0xff]
    %v124 = vld [vmem:[#allocation4 + $0x18] sm:$0xff]
    %v125 = vld [vmem:[#allocation4 + $0x20] sm:$0xff]
    %v126 = vld [vmem:[#allocation4 + $0x28] sm:$0xff]
    %v127 = vld [vmem:[#allocation4 + $0x30] sm:$0xff]
    %v128 = vld [vmem:[#allocation4 + $0x38] sm:$0xff]
    %v129 = vld [vmem:[#allocation4 + $0x40] sm:$0xff]
    %v130 = vld [vmem:[#allocation4 + $0x48] sm:$0xff]
    %v131 = vld [vmem:[#allocation4 + $0x50] sm:$0xff]
    %v132 = vld [vmem:[#allocation4 + $0x58] sm:$0xff]
    %v133 = vld [vmem:[#allocation4 + $0x60] sm:$0xff]
    %v134 = vld [vmem:[#allocation4 + $0x68] sm:$0xff]
    %v135 = vld [vmem:[#allocation4 + $0x70] sm:$0xff]
    %v136 = vld [vmem:[#allocation4 + $0x78] sm:$0xff]
    %v137 = vld [vmem:[%s2] sm:$0x1]
    %v139 = vlaneseq
    %v140 = vshrl.u32 %v139, 7
    %v141 = vsub.s32 0, %v140
    %v142 = vrot.slane %v137, %v141
    %144 = vmatprep.subr.mxu0 0.0
    %145 = vmatpush1.msra.mxu0 %v136
    %146 = vmatprep.subr.mxu0 0.0
    %147 = vmatpush1.msra.mxu0 %v135
    %148 = vmatprep.subr.mxu0 0.0
    %149 = vmatpush1.msra.mxu0 %v134
    %150 = vmatprep.subr.mxu0 0.0
    %151 = vmatpush1.msra.mxu0 %v133
    %152 = vmatprep.subr.mxu0 0.0
    %153 = vmatpush1.msra.mxu0 %v132
    %154 = vmatprep.subr.mxu0 0.0
    %155 = vmatpush1.msra.mxu0 %v131
    %156 = vmatprep.subr.mxu0 0.0
    %157 = vmatpush1.msra.mxu0 %v130
    %158 = vmatprep.subr.mxu0 0.0
    %159 = vmatpush1.msra.mxu0 %v129
    %160 = vmatprep.subr.mxu0 0.0
    %161 = vmatpush1.msra.mxu0 %v128
    %162 = vmatprep.subr.mxu0 0.0
    %163 = vmatpush1.msra.mxu0 %v127
    %164 = vmatprep.subr.mxu0 0.0
    %165 = vmatpush1.msra.mxu0 %v126
    %166 = vmatprep.subr.mxu0 0.0
    %167 = vmatpush1.msra.mxu0 %v125
    %168 = vmatprep.subr.mxu0 0.0
    %169 = vmatpush1.msra.mxu0 %v124
    %170 = vmatprep.subr.mxu0 0.0
    %171 = vmatpush1.msra.mxu0 %v123
    %172 = vmatprep.subr.mxu0 0.0
    %173 = vmatpush1.msra.mxu0 %v122
    %174 = vmatprep.subr.mxu0 0.0
    %175 = vmatpush1.msra.mxu0 %v121
    %176 = vmatprep.subr.mxu0 0.0
    %177 = vmatpush2.msra.mxu0 0.0
    %178 = vmatprep.subr.mxu0 0.0
    %179 = vmatpush2.msra.mxu0 0.0
    %180 = vmatprep.subr.mxu0 0.0
    %181 = vmatpush2.msra.mxu0 0.0
    %182 = vmatprep.subr.mxu0 0.0
    %183 = vmatpush2.msra.mxu0 0.0
    %184 = vmatprep.subr.mxu0 0.0
    %185 = vmatpush2.msra.mxu0 0.0
    %186 = vmatprep.subr.mxu0 0.0
    %187 = vmatpush2.msra.mxu0 0.0
    %188 = vmatprep.subr.mxu0 0.0
    %189 = vmatpush2.msra.mxu0 0.0
    %190 = vmatprep.subr.mxu0 0.0
    %191 = vmatpush2.msra.mxu0 0.0
    %192 = vmatprep.subr.mxu0 0.0
    %193 = vmatpush2.msra.mxu0 0.0
    %194 = vmatprep.subr.mxu0 0.0
    %195 = vmatpush2.msra.mxu0 0.0
    %196 = vmatprep.subr.mxu0 0.0
    %197 = vmatpush2.msra.mxu0 0.0
    %198 = vmatprep.subr.mxu0 0.0
    %199 = vmatpush2.msra.mxu0 0.0
    %200 = vmatprep.subr.mxu0 0.0
    %201 = vmatpush2.msra.mxu0 0.0
    %202 = vmatprep.subr.mxu0 0.0
    %203 = vmatpush2.msra.mxu0 0.0
    %204 = vmatprep.subr.mxu0 0.0
    %205 = vmatpush2.msra.mxu0 0.0
    %206 = vmatprep.subr.mxu0 0.0
    %207 = vmatpush2.msra.mxu0 0.0
    %208 = vmatprep.mubr.f32.mxu0 0.0
    %209 = vmatmul.mubr.f32.gmra.mxu0 %v117
    %v210 = vpop.f32.mrf.mxu0
    %v211 = vadd.f32 %v142, %v210
    %v212 = vpop.f32.mrf.mxu0
    %213 = vmatprep.mubr.f32.mxu0 0.0
    %214 = vmatmul.mubr.f32.gmra.mxu0 %v120
    %v215 = vpop.f32.mrf.mxu0
    %v216 = vadd.f32 %v142, %v215
    %v217 = vpop.f32.mrf.mxu0
    %218 = vdwg.mxu0
    %v221 = vcombine.high %v211, %v211
    %v223 = vunpack.c.l.s4 1983009808
    %v224 = vunpack.c.0.s8 %v223
    %v225 = vlaneseq
    %v226 = vshrl.u32 %v225, 7
    %v227 = vsub.s32 %v224, %v226
    %v228 = vrot.slane %v211, %v227
    %v230 = vunpack.c.l.s4 1983009808
    %v231 = vunpack.c.0.s8 %v230
    %v232 = vlaneseq
    %v233 = vshrl.u32 %v232, 7
    %v234 = vsub.s32 %v231, %v233
    %v235 = vrot.slane %v221, %v234
    %v236 = vcombine.high %v228, %v228
    %v237 = vcombine.high %v235, %v235
    %v238 = vcombine.high %v216, %v216
    %v240 = vunpack.c.l.s4 1983009808
    %v241 = vunpack.c.0.s8 %v240
    %v242 = vlaneseq
    %v243 = vshrl.u32 %v242, 7
    %v244 = vsub.s32 %v241, %v243
    %v245 = vrot.slane %v216, %v244
    %v247 = vunpack.c.l.s4 1983009808
    %v248 = vunpack.c.0.s8 %v247
    %v249 = vlaneseq
    %v250 = vshrl.u32 %v249, 7
    %v251 = vsub.s32 %v248, %v250
    %v252 = vrot.slane %v238, %v251
    %v253 = vcombine.high %v245, %v245
    %v254 = vcombine.high %v252, %v252
    %263 = vst [vmem:[#allocation2] sm:$0x3] %v228
    %264 = vst [vmem:[#allocation2 + $0x2] sm:$0x3] %v236
    %265 = vst [vmem:[#allocation2 + $0x4] sm:$0x3] %v235
    %266 = vst [vmem:[#allocation2 + $0x6] sm:$0x3] %v237
    %267 = vst [vmem:[#allocation2 + $0x8] sm:$0x3] %v245
    %268 = vst [vmem:[#allocation2 + $0xa] sm:$0x3] %v253
    %269 = vst [vmem:[#allocation2 + $0xc] sm:$0x3] %v252
    %270 = vst [vmem:[#allocation2 + $0xe] sm:$0x3] %v254
    %v271 = vld [vmem:[%s3] sm:$0xff]
    %v272 = vld [vmem:[%s3 + $0x8] sm:$0xff]
    %v273 = vld [vmem:[%s3 + $0x10] sm:$0xff]
    %v274 = vld [vmem:[%s3 + $0x18] sm:$0xff]
    %v275 = vlaneseq
    %v276 = vand.u32 %v275, 127
    %vm277 = vcmp.ge.s32.totalorder %v276, 64
    %vm278 = vcmp.lt.s32.totalorder %v276, 96
    %vm279 = vmand %vm277, %vm278
    %v280 = vld [vmem:[#allocation2] sm:$0x3]
    %vm281 = vcmask 261120
    %v283 = vsel %vm281, 0.0, 0
    %285 = vmatprep.subr.mxu0 0.0
    %286 = vmatpush1.msra.mxu0 0.0
    %287 = vmatprep.subr.mxu0 0.0
    %288 = vmatpush1.msra.mxu0 0.0
    %289 = vmatprep.subr.mxu0 0.0
    %290 = vmatpush1.msra.mxu0 0.0
    %291 = vmatprep.subr.mxu0 0.0
    %292 = vmatpush1.msra.mxu0 0.0
    %293 = vmatprep.subr.mxu0 0.0
    %294 = vmatpush1.msra.mxu0 0.0
    %295 = vmatprep.subr.mxu0 0.0
    %296 = vmatpush1.msra.mxu0 0.0
    %297 = vmatprep.subr.mxu0 0.0
    %298 = vmatpush1.msra.mxu0 0.0
    %299 = vmatprep.subr.mxu0 0.0
    %300 = vmatpush1.msra.mxu0 0.0
    %301 = vmatprep.subr.mxu0 0.0
    %302 = vmatpush1.msra.mxu0 0.0
    %303 = vmatprep.subr.mxu0 0.0
    %304 = vmatpush1.msra.mxu0 0.0
    %305 = vmatprep.subr.mxu0 0.0
    %306 = vmatpush1.msra.mxu0 0.0
    %307 = vmatprep.subr.mxu0 0.0
    %308 = vmatpush1.msra.mxu0 0.0
    %309 = vmatprep.subr.mxu0 0.0
    %310 = vmatpush1.msra.mxu0 %v274
    %311 = vmatprep.subr.mxu0 0.0
    %312 = vmatpush1.msra.mxu0 %v273
    %313 = vmatprep.subr.mxu0 0.0
    %314 = vmatpush1.msra.mxu0 %v272
    %315 = vmatprep.subr.mxu0 0.0
    %316 = vmatpush1.msra.mxu0 %v271
    %317 = vmatprep.subr.mxu0 0.0
    %318 = vmatpush2.msra.mxu0 0.0
    %319 = vmatprep.subr.mxu0 0.0
    %320 = vmatpush2.msra.mxu0 0.0
    %321 = vmatprep.subr.mxu0 0.0
    %322 = vmatpush2.msra.mxu0 0.0
    %323 = vmatprep.subr.mxu0 0.0
    %324 = vmatpush2.msra.mxu0 0.0
    %325 = vmatprep.subr.mxu0 0.0
    %326 = vmatpush2.msra.mxu0 0.0
    %327 = vmatprep.subr.mxu0 0.0
    %328 = vmatpush2.msra.mxu0 0.0
    %329 = vmatprep.subr.mxu0 0.0
    %330 = vmatpush2.msra.mxu0 0.0
    %331 = vmatprep.subr.mxu0 0.0
    %332 = vmatpush2.msra.mxu0 0.0
    %333 = vmatprep.subr.mxu0 0.0
    %334 = vmatpush2.msra.mxu0 0.0
    %335 = vmatprep.subr.mxu0 0.0
    %336 = vmatpush2.msra.mxu0 0.0
    %337 = vmatprep.subr.mxu0 0.0
    %338 = vmatpush2.msra.mxu0 0.0
    %339 = vmatprep.subr.mxu0 0.0
    %340 = vmatpush2.msra.mxu0 0.0
    %341 = vmatprep.subr.mxu0 0.0
    %342 = vmatpush2.msra.mxu0 0.0
    %343 = vmatprep.subr.mxu0 0.0
    %344 = vmatpush2.msra.mxu0 0.0
    %345 = vmatprep.subr.mxu0 0.0
    %346 = vmatpush2.msra.mxu0 0.0
    %347 = vmatprep.subr.mxu0 0.0
    %348 = vmatpush2.msra.mxu0 0.0
    %349 = vmatprep.mubr.f32.mxu0 0.0
    %350 = vmatmul.mubr.f32.gmra.mxu0 %v283
    %v351 = vpop.f32.mrf.mxu0
    %v352 = vadd.f32 0.0, %v351
    %v353 = vpop.f32.mrf.mxu0
    %354 = vdwg.mxu0
    %v355 = vadd.f32 %v280, %v352
    %v356 = vtanh.pop %v355
    %v357 = vmul.f32 %v356, 0.5
    %v358 = vadd.f32 %v357, 0.5
    %v359 = vsel %vm279, 1, 0
    %vm360 = vcmp.eq.s32.totalorder %v359, 1
    %v361 = vsel %vm360, %v356, %v358
    %v362 = vmul.f32 %v361, 0.0
    %364 = vrot.lane.b32.xlu0 %v361, 64
    %v365 = vpop.permute.xlu0 %364
    %v367 = vmul.f32 %v361, %v365
    %369 = vrot.lane.b32.xlu0 %v367, 32
    %v370 = vpop.permute.xlu0 %369
    %v372 = vadd.f32 %v362, %v370
    %v373 = vtanh.pop %v372
    %375 = vrot.lane.b32.xlu0 %v373, 64
    %v376 = vpop.permute.xlu0 %375
    %v378 = vmul.f32 %v361, %v376
    %380 = vrot.lane.b32.xlu0 %v378, 32
    %v381 = vpop.permute.xlu0 %380
    %vm383 = vcmask 254976
    %384 = vst.msk [vmem:[#allocation3] sm:$0x3] %vm383, %v381
    %s385 = scalar_lea.vmem [#allocation2], 2
    %v386 = vld [vmem:[%s385] sm:$0x3]
    %v387 = vsel %vm281, %v381, 0
    %389 = vmatprep.subr.mxu0 0.0
    %390 = vmatpush1.msra.mxu0 0.0
    %391 = vmatprep.subr.mxu0 0.0
    %392 = vmatpush1.msra.mxu0 0.0
    %393 = vmatprep.subr.mxu0 0.0
    %394 = vmatpush1.msra.mxu0 0.0
    %395 = vmatprep.subr.mxu0 0.0
    %396 = vmatpush1.msra.mxu0 0.0
    %397 = vmatprep.subr.mxu0 0.0
    %398 = vmatpush1.msra.mxu0 0.0
    %399 = vmatprep.subr.mxu0 0.0
    %400 = vmatpush1.msra.mxu0 0.0
    %401 = vmatprep.subr.mxu0 0.0
    %402 = vmatpush1.msra.mxu0 0.0
    %403 = vmatprep.subr.mxu0 0.0
    %404 = vmatpush1.msra.mxu0 0.0
    %405 = vmatprep.subr.mxu0 0.0
    %406 = vmatpush1.msra.mxu0 0.0
    %407 = vmatprep.subr.mxu0 0.0
    %408 = vmatpush1.msra.mxu0 0.0
    %409 = vmatprep.subr.mxu0 0.0
    %410 = vmatpush1.msra.mxu0 0.0
    %411 = vmatprep.subr.mxu0 0.0
    %412 = vmatpush1.msra.mxu0 0.0
    %413 = vmatprep.subr.mxu0 0.0
    %414 = vmatpush1.msra.mxu0 %v274
    %415 = vmatprep.subr.mxu0 0.0
    %416 = vmatpush1.msra.mxu0 %v273
    %417 = vmatprep.subr.mxu0 0.0
    %418 = vmatpush1.msra.mxu0 %v272
    %419 = vmatprep.subr.mxu0 0.0
    %420 = vmatpush1.msra.mxu0 %v271
    %421 = vmatprep.subr.mxu0 0.0
    %422 = vmatpush2.msra.mxu0 0.0
    %423 = vmatprep.subr.mxu0 0.0
    %424 = vmatpush2.msra.mxu0 0.0
    %425 = vmatprep.subr.mxu0 0.0
    %426 = vmatpush2.msra.mxu0 0.0
    %427 = vmatprep.subr.mxu0 0.0
    %428 = vmatpush2.msra.mxu0 0.0
    %429 = vmatprep.subr.mxu0 0.0
    %430 = vmatpush2.msra.mxu0 0.0
    %431 = vmatprep.subr.mxu0 0.0
    %432 = vmatpush2.msra.mxu0 0.0
    %433 = vmatprep.subr.mxu0 0.0
    %434 = vmatpush2.msra.mxu0 0.0
    %435 = vmatprep.subr.mxu0 0.0
    %436 = vmatpush2.msra.mxu0 0.0
    %437 = vmatprep.subr.mxu0 0.0
    %438 = vmatpush2.msra.mxu0 0.0
    %439 = vmatprep.subr.mxu0 0.0
    %440 = vmatpush2.msra.mxu0 0.0
    %441 = vmatprep.subr.mxu0 0.0
    %442 = vmatpush2.msra.mxu0 0.0
    %443 = vmatprep.subr.mxu0 0.0
    %444 = vmatpush2.msra.mxu0 0.0
    %445 = vmatprep.subr.mxu0 0.0
    %446 = vmatpush2.msra.mxu0 0.0
    %447 = vmatprep.subr.mxu0 0.0
    %448 = vmatpush2.msra.mxu0 0.0
    %449 = vmatprep.subr.mxu0 0.0
    %450 = vmatpush2.msra.mxu0 0.0
    %451 = vmatprep.subr.mxu0 0.0
    %452 = vmatpush2.msra.mxu0 0.0
    %453 = vmatprep.mubr.f32.mxu0 0.0
    %454 = vmatmul.mubr.f32.gmra.mxu0 %v387
    %v455 = vpop.f32.mrf.mxu0
    %v456 = vadd.f32 0.0, %v455
    %v457 = vpop.f32.mrf.mxu0
    %458 = vdwg.mxu0
    %v459 = vadd.f32 %v386, %v456
    %v460 = vtanh.pop %v459
    %v461 = vmul.f32 %v460, 0.5
    %v462 = vadd.f32 %v461, 0.5
    %v463 = vsel %vm360, %v460, %v462
    %v464 = vmul.f32 %v463, %v372
    %466 = vrot.lane.b32.xlu0 %v463, 64
    %v467 = vpop.permute.xlu0 %466
    %v469 = vmul.f32 %v463, %v467
    %471 = vrot.lane.b32.xlu0 %v469, 32
    %v472 = vpop.permute.xlu0 %471
    %v474 = vadd.f32 %v464, %v472
    %v475 = vtanh.pop %v474
    %477 = vrot.lane.b32.xlu0 %v475, 64
    %v478 = vpop.permute.xlu0 %477
    %v480 = vmul.f32 %v463, %v478
    %482 = vrot.lane.b32.xlu0 %v480, 32
    %v483 = vpop.permute.xlu0 %482
    %s485 = scalar_lea.vmem [#allocation3], 2
    %486 = vst.msk [vmem:[%s485] sm:$0x3] %vm383, %v483
    %s487 = scalar_lea.vmem [#allocation2], 4
    %v488 = vld [vmem:[%s487] sm:$0x3]
    %v489 = vsel %vm281, %v483, 0
    %491 = vmatprep.subr.mxu0 0.0
    %492 = vmatpush1.msra.mxu0 0.0
    %493 = vmatprep.subr.mxu0 0.0
    %494 = vmatpush1.msra.mxu0 0.0
    %495 = vmatprep.subr.mxu0 0.0
    %496 = vmatpush1.msra.mxu0 0.0
    %497 = vmatprep.subr.mxu0 0.0
    %498 = vmatpush1.msra.mxu0 0.0
    %499 = vmatprep.subr.mxu0 0.0
    %500 = vmatpush1.msra.mxu0 0.0
    %501 = vmatprep.subr.mxu0 0.0
    %502 = vmatpush1.msra.mxu0 0.0
    %503 = vmatprep.subr.mxu0 0.0
    %504 = vmatpush1.msra.mxu0 0.0
    %505 = vmatprep.subr.mxu0 0.0
    %506 = vmatpush1.msra.mxu0 0.0
    %507 = vmatprep.subr.mxu0 0.0
    %508 = vmatpush1.msra.mxu0 0.0
    %509 = vmatprep.subr.mxu0 0.0
    %510 = vmatpush1.msra.mxu0 0.0
    %511 = vmatprep.subr.mxu0 0.0
    %512 = vmatpush1.msra.mxu0 0.0
    %513 = vmatprep.subr.mxu0 0.0
    %514 = vmatpush1.msra.mxu0 0.0
    %515 = vmatprep.subr.mxu0 0.0
    %516 = vmatpush1.msra.mxu0 %v274
    %517 = vmatprep.subr.mxu0 0.0
    %518 = vmatpush1.msra.mxu0 %v273
    %519 = vmatprep.subr.mxu0 0.0
    %520 = vmatpush1.msra.mxu0 %v272
    %521 = vmatprep.subr.mxu0 0.0
    %522 = vmatpush1.msra.mxu0 %v271
    %523 = vmatprep.subr.mxu0 0.0
    %524 = vmatpush2.msra.mxu0 0.0
    %525 = vmatprep.subr.mxu0 0.0
    %526 = vmatpush2.msra.mxu0 0.0
    %527 = vmatprep.subr.mxu0 0.0
    %528 = vmatpush2.msra.mxu0 0.0
    %529 = vmatprep.subr.mxu0 0.0
    %530 = vmatpush2.msra.mxu0 0.0
    %531 = vmatprep.subr.mxu0 0.0
    %532 = vmatpush2.msra.mxu0 0.0
    %533 = vmatprep.subr.mxu0 0.0
    %534 = vmatpush2.msra.mxu0 0.0
    %535 = vmatprep.subr.mxu0 0.0
    %536 = vmatpush2.msra.mxu0 0.0
    %537 = vmatprep.subr.mxu0 0.0
    %538 = vmatpush2.msra.mxu0 0.0
    %539 = vmatprep.subr.mxu0 0.0
    %540 = vmatpush2.msra.mxu0 0.0
    %541 = vmatprep.subr.mxu0 0.0
    %542 = vmatpush2.msra.mxu0 0.0
    %543 = vmatprep.subr.mxu0 0.0
    %544 = vmatpush2.msra.mxu0 0.0
    %545 = vmatprep.subr.mxu0 0.0
    %546 = vmatpush2.msra.mxu0 0.0
    %547 = vmatprep.subr.mxu0 0.0
    %548 = vmatpush2.msra.mxu0 0.0
    %549 = vmatprep.subr.mxu0 0.0
    %550 = vmatpush2.msra.mxu0 0.0
    %551 = vmatprep.subr.mxu0 0.0
    %552 = vmatpush2.msra.mxu0 0.0
    %553 = vmatprep.subr.mxu0 0.0
    %554 = vmatpush2.msra.mxu0 0.0
    %555 = vmatprep.mubr.f32.mxu0 0.0
    %556 = vmatmul.mubr.f32.gmra.mxu0 %v489
    %v557 = vpop.f32.mrf.mxu0
    %v558 = vadd.f32 0.0, %v557
    %v559 = vpop.f32.mrf.mxu0
    %560 = vdwg.mxu0
    %v561 = vadd.f32 %v488, %v558
    %v562 = vtanh.pop %v561
    %v563 = vmul.f32 %v562, 0.5
    %v564 = vadd.f32 %v563, 0.5
    %v565 = vsel %vm360, %v562, %v564
    %v566 = vmul.f32 %v565, %v474
    %568 = vrot.lane.b32.xlu0 %v565, 64
    %v569 = vpop.permute.xlu0 %568
    %v571 = vmul.f32 %v565, %v569
    %573 = vrot.lane.b32.xlu0 %v571, 32
    %v574 = vpop.permute.xlu0 %573
    %v576 = vadd.f32 %v566, %v574
    %v577 = vtanh.pop %v576
    %579 = vrot.lane.b32.xlu0 %v577, 64
    %v580 = vpop.permute.xlu0 %579
    %v582 = vmul.f32 %v565, %v580
    %584 = vrot.lane.b32.xlu0 %v582, 32
    %v585 = vpop.permute.xlu0 %584
    %s587 = scalar_lea.vmem [#allocation3], 4
    %588 = vst.msk [vmem:[%s587] sm:$0x3] %vm383, %v585
    %s589 = scalar_lea.vmem [#allocation2], 6
    %v590 = vld [vmem:[%s589] sm:$0x3]
    %v591 = vsel %vm281, %v585, 0
    %593 = vmatprep.subr.mxu0 0.0
    %594 = vmatpush1.msra.mxu0 0.0
    %595 = vmatprep.subr.mxu0 0.0
    %596 = vmatpush1.msra.mxu0 0.0
    %597 = vmatprep.subr.mxu0 0.0
    %598 = vmatpush1.msra.mxu0 0.0
    %599 = vmatprep.subr.mxu0 0.0
    %600 = vmatpush1.msra.mxu0 0.0
    %601 = vmatprep.subr.mxu0 0.0
    %602 = vmatpush1.msra.mxu0 0.0
    %603 = vmatprep.subr.mxu0 0.0
    %604 = vmatpush1.msra.mxu0 0.0
    %605 = vmatprep.subr.mxu0 0.0
    %606 = vmatpush1.msra.mxu0 0.0
    %607 = vmatprep.subr.mxu0 0.0
    %608 = vmatpush1.msra.mxu0 0.0
    %609 = vmatprep.subr.mxu0 0.0
    %610 = vmatpush1.msra.mxu0 0.0
    %611 = vmatprep.subr.mxu0 0.0
    %612 = vmatpush1.msra.mxu0 0.0
    %613 = vmatprep.subr.mxu0 0.0
    %614 = vmatpush1.msra.mxu0 0.0
    %615 = vmatprep.subr.mxu0 0.0
    %616 = vmatpush1.msra.mxu0 0.0
    %617 = vmatprep.subr.mxu0 0.0
    %618 = vmatpush1.msra.mxu0 %v274
    %619 = vmatprep.subr.mxu0 0.0
    %620 = vmatpush1.msra.mxu0 %v273
    %621 = vmatprep.subr.mxu0 0.0
    %622 = vmatpush1.msra.mxu0 %v272
    %623 = vmatprep.subr.mxu0 0.0
    %624 = vmatpush1.msra.mxu0 %v271
    %625 = vmatprep.subr.mxu0 0.0
    %626 = vmatpush2.msra.mxu0 0.0
    %627 = vmatprep.subr.mxu0 0.0
    %628 = vmatpush2.msra.mxu0 0.0
    %629 = vmatprep.subr.mxu0 0.0
    %630 = vmatpush2.msra.mxu0 0.0
    %631 = vmatprep.subr.mxu0 0.0
    %632 = vmatpush2.msra.mxu0 0.0
    %633 = vmatprep.subr.mxu0 0.0
    %634 = vmatpush2.msra.mxu0 0.0
    %635 = vmatprep.subr.mxu0 0.0
    %636 = vmatpush2.msra.mxu0 0.0
    %637 = vmatprep.subr.mxu0 0.0
    %638 = vmatpush2.msra.mxu0 0.0
    %639 = vmatprep.subr.mxu0 0.0
    %640 = vmatpush2.msra.mxu0 0.0
    %641 = vmatprep.subr.mxu0 0.0
    %642 = vmatpush2.msra.mxu0 0.0
    %643 = vmatprep.subr.mxu0 0.0
    %644 = vmatpush2.msra.mxu0 0.0
    %645 = vmatprep.subr.mxu0 0.0
    %646 = vmatpush2.msra.mxu0 0.0
    %647 = vmatprep.subr.mxu0 0.0
    %648 = vmatpush2.msra.mxu0 0.0
    %649 = vmatprep.subr.mxu0 0.0
    %650 = vmatpush2.msra.mxu0 0.0
    %651 = vmatprep.subr.mxu0 0.0
    %652 = vmatpush2.msra.mxu0 0.0
    %653 = vmatprep.subr.mxu0 0.0
    %654 = vmatpush2.msra.mxu0 0.0
    %655 = vmatprep.subr.mxu0 0.0
    %656 = vmatpush2.msra.mxu0 0.0
    %657 = vmatprep.mubr.f32.mxu0 0.0
    %658 = vmatmul.mubr.f32.gmra.mxu0 %v591
    %v659 = vpop.f32.mrf.mxu0
    %v660 = vadd.f32 0.0, %v659
    %v661 = vpop.f32.mrf.mxu0
    %662 = vdwg.mxu0
    %v663 = vadd.f32 %v590, %v660
    %v664 = vtanh.pop %v663
    %v665 = vmul.f32 %v664, 0.5
    %v666 = vadd.f32 %v665, 0.5
    %v667 = vsel %vm360, %v664, %v666
    %v668 = vmul.f32 %v667, %v576
    %670 = vrot.lane.b32.xlu0 %v667, 64
    %v671 = vpop.permute.xlu0 %670
    %v673 = vmul.f32 %v667, %v671
    %675 = vrot.lane.b32.xlu0 %v673, 32
    %v676 = vpop.permute.xlu0 %675
    %v678 = vadd.f32 %v668, %v676
    %v679 = vtanh.pop %v678
    %681 = vrot.lane.b32.xlu0 %v679, 64
    %v682 = vpop.permute.xlu0 %681
    %v684 = vmul.f32 %v667, %v682
    %686 = vrot.lane.b32.xlu0 %v684, 32
    %v687 = vpop.permute.xlu0 %686
    %s689 = scalar_lea.vmem [#allocation3], 6
    %690 = vst.msk [vmem:[%s689] sm:$0x3] %vm383, %v687
    %s691 = scalar_lea.vmem [#allocation2], 8
    %v692 = vld [vmem:[%s691] sm:$0x3]
    %v693 = vsel %vm281, %v687, 0
    %695 = vmatprep.subr.mxu0 0.0
    %696 = vmatpush1.msra.mxu0 0.0
    %697 = vmatprep.subr.mxu0 0.0
    %698 = vmatpush1.msra.mxu0 0.0
    %699 = vmatprep.subr.mxu0 0.0
    %700 = vmatpush1.msra.mxu0 0.0
    %701 = vmatprep.subr.mxu0 0.0
    %702 = vmatpush1.msra.mxu0 0.0
    %703 = vmatprep.subr.mxu0 0.0
    %704 = vmatpush1.msra.mxu0 0.0
    %705 = vmatprep.subr.mxu0 0.0
    %706 = vmatpush1.msra.mxu0 0.0
    %707 = vmatprep.subr.mxu0 0.0
    %708 = vmatpush1.msra.mxu0 0.0
    %709 = vmatprep.subr.mxu0 0.0
    %710 = vmatpush1.msra.mxu0 0.0
    %711 = vmatprep.subr.mxu0 0.0
    %712 = vmatpush1.msra.mxu0 0.0
    %713 = vmatprep.subr.mxu0 0.0
    %714 = vmatpush1.msra.mxu0 0.0
    %715 = vmatprep.subr.mxu0 0.0
    %716 = vmatpush1.msra.mxu0 0.0
    %717 = vmatprep.subr.mxu0 0.0
    %718 = vmatpush1.msra.mxu0 0.0
    %719 = vmatprep.subr.mxu0 0.0
    %720 = vmatpush1.msra.mxu0 %v274
    %721 = vmatprep.subr.mxu0 0.0
    %722 = vmatpush1.msra.mxu0 %v273
    %723 = vmatprep.subr.mxu0 0.0
    %724 = vmatpush1.msra.mxu0 %v272
    %725 = vmatprep.subr.mxu0 0.0
    %726 = vmatpush1.msra.mxu0 %v271
    %727 = vmatprep.subr.mxu0 0.0
    %728 = vmatpush2.msra.mxu0 0.0
    %729 = vmatprep.subr.mxu0 0.0
    %730 = vmatpush2.msra.mxu0 0.0
    %731 = vmatprep.subr.mxu0 0.0
    %732 = vmatpush2.msra.mxu0 0.0
    %733 = vmatprep.subr.mxu0 0.0
    %734 = vmatpush2.msra.mxu0 0.0
    %735 = vmatprep.subr.mxu0 0.0
    %736 = vmatpush2.msra.mxu0 0.0
    %737 = vmatprep.subr.mxu0 0.0
    %738 = vmatpush2.msra.mxu0 0.0
    %739 = vmatprep.subr.mxu0 0.0
    %740 = vmatpush2.msra.mxu0 0.0
    %741 = vmatprep.subr.mxu0 0.0
    %742 = vmatpush2.msra.mxu0 0.0
    %743 = vmatprep.subr.mxu0 0.0
    %744 = vmatpush2.msra.mxu0 0.0
    %745 = vmatprep.subr.mxu0 0.0
    %746 = vmatpush2.msra.mxu0 0.0
    %747 = vmatprep.subr.mxu0 0.0
    %748 = vmatpush2.msra.mxu0 0.0
    %749 = vmatprep.subr.mxu0 0.0
    %750 = vmatpush2.msra.mxu0 0.0
    %751 = vmatprep.subr.mxu0 0.0
    %752 = vmatpush2.msra.mxu0 0.0
    %753 = vmatprep.subr.mxu0 0.0
    %754 = vmatpush2.msra.mxu0 0.0
    %755 = vmatprep.subr.mxu0 0.0
    %756 = vmatpush2.msra.mxu0 0.0
    %757 = vmatprep.subr.mxu0 0.0
    %758 = vmatpush2.msra.mxu0 0.0
    %759 = vmatprep.mubr.f32.mxu0 0.0
    %760 = vmatmul.mubr.f32.gmra.mxu0 %v693
    %v761 = vpop.f32.mrf.mxu0
    %v762 = vadd.f32 0.0, %v761
    %v763 = vpop.f32.mrf.mxu0
    %764 = vdwg.mxu0
    %v765 = vadd.f32 %v692, %v762
    %v766 = vtanh.pop %v765
    %v767 = vmul.f32 %v766, 0.5
    %v768 = vadd.f32 %v767, 0.5
    %v769 = vsel %vm360, %v766, %v768
    %v770 = vmul.f32 %v769, %v678
    %772 = vrot.lane.b32.xlu0 %v769, 64
    %v773 = vpop.permute.xlu0 %772
    %v775 = vmul.f32 %v769, %v773
    %777 = vrot.lane.b32.xlu0 %v775, 32
    %v778 = vpop.permute.xlu0 %777
    %v780 = vadd.f32 %v770, %v778
    %v781 = vtanh.pop %v780
    %783 = vrot.lane.b32.xlu0 %v781, 64
    %v784 = vpop.permute.xlu0 %783
    %v786 = vmul.f32 %v769, %v784
    %788 = vrot.lane.b32.xlu0 %v786, 32
    %v789 = vpop.permute.xlu0 %788
    %s791 = scalar_lea.vmem [#allocation3], 8
    %792 = vst.msk [vmem:[%s791] sm:$0x3] %vm383, %v789
    %s793 = scalar_lea.vmem [#allocation2], 10
    %v794 = vld [vmem:[%s793] sm:$0x3]
    %v795 = vsel %vm281, %v789, 0
    %797 = vmatprep.subr.mxu0 0.0
    %798 = vmatpush1.msra.mxu0 0.0
    %799 = vmatprep.subr.mxu0 0.0
    %800 = vmatpush1.msra.mxu0 0.0
    %801 = vmatprep.subr.mxu0 0.0
    %802 = vmatpush1.msra.mxu0 0.0
    %803 = vmatprep.subr.mxu0 0.0
    %804 = vmatpush1.msra.mxu0 0.0
    %805 = vmatprep.subr.mxu0 0.0
    %806 = vmatpush1.msra.mxu0 0.0
    %807 = vmatprep.subr.mxu0 0.0
    %808 = vmatpush1.msra.mxu0 0.0
    %809 = vmatprep.subr.mxu0 0.0
    %810 = vmatpush1.msra.mxu0 0.0
    %811 = vmatprep.subr.mxu0 0.0
    %812 = vmatpush1.msra.mxu0 0.0
    %813 = vmatprep.subr.mxu0 0.0
    %814 = vmatpush1.msra.mxu0 0.0
    %815 = vmatprep.subr.mxu0 0.0
    %816 = vmatpush1.msra.mxu0 0.0
    %817 = vmatprep.subr.mxu0 0.0
    %818 = vmatpush1.msra.mxu0 0.0
    %819 = vmatprep.subr.mxu0 0.0
    %820 = vmatpush1.msra.mxu0 0.0
    %821 = vmatprep.subr.mxu0 0.0
    %822 = vmatpush1.msra.mxu0 %v274
    %823 = vmatprep.subr.mxu0 0.0
    %824 = vmatpush1.msra.mxu0 %v273
    %825 = vmatprep.subr.mxu0 0.0
    %826 = vmatpush1.msra.mxu0 %v272
    %827 = vmatprep.subr.mxu0 0.0
    %828 = vmatpush1.msra.mxu0 %v271
    %829 = vmatprep.subr.mxu0 0.0
    %830 = vmatpush2.msra.mxu0 0.0
    %831 = vmatprep.subr.mxu0 0.0
    %832 = vmatpush2.msra.mxu0 0.0
    %833 = vmatprep.subr.mxu0 0.0
    %834 = vmatpush2.msra.mxu0 0.0
    %835 = vmatprep.subr.mxu0 0.0
    %836 = vmatpush2.msra.mxu0 0.0
    %837 = vmatprep.subr.mxu0 0.0
    %838 = vmatpush2.msra.mxu0 0.0
    %839 = vmatprep.subr.mxu0 0.0
    %840 = vmatpush2.msra.mxu0 0.0
    %841 = vmatprep.subr.mxu0 0.0
    %842 = vmatpush2.msra.mxu0 0.0
    %843 = vmatprep.subr.mxu0 0.0
    %844 = vmatpush2.msra.mxu0 0.0
    %845 = vmatprep.subr.mxu0 0.0
    %846 = vmatpush2.msra.mxu0 0.0
    %847 = vmatprep.subr.mxu0 0.0
    %848 = vmatpush2.msra.mxu0 0.0
    %849 = vmatprep.subr.mxu0 0.0
    %850 = vmatpush2.msra.mxu0 0.0
    %851 = vmatprep.subr.mxu0 0.0
    %852 = vmatpush2.msra.mxu0 0.0
    %853 = vmatprep.subr.mxu0 0.0
    %854 = vmatpush2.msra.mxu0 0.0
    %855 = vmatprep.subr.mxu0 0.0
    %856 = vmatpush2.msra.mxu0 0.0
    %857 = vmatprep.subr.mxu0 0.0
    %858 = vmatpush2.msra.mxu0 0.0
    %859 = vmatprep.subr.mxu0 0.0
    %860 = vmatpush2.msra.mxu0 0.0
    %861 = vmatprep.mubr.f32.mxu0 0.0
    %862 = vmatmul.mubr.f32.gmra.mxu0 %v795
    %v863 = vpop.f32.mrf.mxu0
    %v864 = vadd.f32 0.0, %v863
    %v865 = vpop.f32.mrf.mxu0
    %866 = vdwg.mxu0
    %v867 = vadd.f32 %v794, %v864
    %v868 = vtanh.pop %v867
    %v869 = vmul.f32 %v868, 0.5
    %v870 = vadd.f32 %v869, 0.5
    %v871 = vsel %vm360, %v868, %v870
    %v872 = vmul.f32 %v871, %v780
    %874 = vrot.lane.b32.xlu0 %v871, 64
    %v875 = vpop.permute.xlu0 %874
    %v877 = vmul.f32 %v871, %v875
    %879 = vrot.lane.b32.xlu0 %v877, 32
    %v880 = vpop.permute.xlu0 %879
    %v882 = vadd.f32 %v872, %v880
    %v883 = vtanh.pop %v882
    %885 = vrot.lane.b32.xlu0 %v883, 64
    %v886 = vpop.permute.xlu0 %885
    %v888 = vmul.f32 %v871, %v886
    %890 = vrot.lane.b32.xlu0 %v888, 32
    %v891 = vpop.permute.xlu0 %890
    %s893 = scalar_lea.vmem [#allocation3], 10
    %894 = vst.msk [vmem:[%s893] sm:$0x3] %vm383, %v891
    %s895 = scalar_lea.vmem [#allocation2], 12
    %v896 = vld [vmem:[%s895] sm:$0x3]
    %v897 = vsel %vm281, %v891, 0
    %899 = vmatprep.subr.mxu0 0.0
    %900 = vmatpush1.msra.mxu0 0.0
    %901 = vmatprep.subr.mxu0 0.0
    %902 = vmatpush1.msra.mxu0 0.0
    %903 = vmatprep.subr.mxu0 0.0
    %904 = vmatpush1.msra.mxu0 0.0
    %905 = vmatprep.subr.mxu0 0.0
    %906 = vmatpush1.msra.mxu0 0.0
    %907 = vmatprep.subr.mxu0 0.0
    %908 = vmatpush1.msra.mxu0 0.0
    %909 = vmatprep.subr.mxu0 0.0
    %910 = vmatpush1.msra.mxu0 0.0
    %911 = vmatprep.subr.mxu0 0.0
    %912 = vmatpush1.msra.mxu0 0.0
    %913 = vmatprep.subr.mxu0 0.0
    %914 = vmatpush1.msra.mxu0 0.0
    %915 = vmatprep.subr.mxu0 0.0
    %916 = vmatpush1.msra.mxu0 0.0
    %917 = vmatprep.subr.mxu0 0.0
    %918 = vmatpush1.msra.mxu0 0.0
    %919 = vmatprep.subr.mxu0 0.0
    %920 = vmatpush1.msra.mxu0 0.0
    %921 = vmatprep.subr.mxu0 0.0
    %922 = vmatpush1.msra.mxu0 0.0
    %923 = vmatprep.subr.mxu0 0.0
    %924 = vmatpush1.msra.mxu0 %v274
    %925 = vmatprep.subr.mxu0 0.0
    %926 = vmatpush1.msra.mxu0 %v273
    %927 = vmatprep.subr.mxu0 0.0
    %928 = vmatpush1.msra.mxu0 %v272
    %929 = vmatprep.subr.mxu0 0.0
    %930 = vmatpush1.msra.mxu0 %v271
    %931 = vmatprep.subr.mxu0 0.0
    %932 = vmatpush2.msra.mxu0 0.0
    %933 = vmatprep.subr.mxu0 0.0
    %934 = vmatpush2.msra.mxu0 0.0
    %935 = vmatprep.subr.mxu0 0.0
    %936 = vmatpush2.msra.mxu0 0.0
    %937 = vmatprep.subr.mxu0 0.0
    %938 = vmatpush2.msra.mxu0 0.0
    %939 = vmatprep.subr.mxu0 0.0
    %940 = vmatpush2.msra.mxu0 0.0
    %941 = vmatprep.subr.mxu0 0.0
    %942 = vmatpush2.msra.mxu0 0.0
    %943 = vmatprep.subr.mxu0 0.0
    %944 = vmatpush2.msra.mxu0 0.0
    %945 = vmatprep.subr.mxu0 0.0
    %946 = vmatpush2.msra.mxu0 0.0
    %947 = vmatprep.subr.mxu0 0.0
    %948 = vmatpush2.msra.mxu0 0.0
    %949 = vmatprep.subr.mxu0 0.0
    %950 = vmatpush2.msra.mxu0 0.0
    %951 = vmatprep.subr.mxu0 0.0
    %952 = vmatpush2.msra.mxu0 0.0
    %953 = vmatprep.subr.mxu0 0.0
    %954 = vmatpush2.msra.mxu0 0.0
    %955 = vmatprep.subr.mxu0 0.0
    %956 = vmatpush2.msra.mxu0 0.0
    %957 = vmatprep.subr.mxu0 0.0
    %958 = vmatpush2.msra.mxu0 0.0
    %959 = vmatprep.subr.mxu0 0.0
    %960 = vmatpush2.msra.mxu0 0.0
    %961 = vmatprep.subr.mxu0 0.0
    %962 = vmatpush2.msra.mxu0 0.0
    %963 = vmatprep.mubr.f32.mxu0 0.0
    %964 = vmatmul.mubr.f32.gmra.mxu0 %v897
    %v965 = vpop.f32.mrf.mxu0
    %v966 = vadd.f32 0.0, %v965
    %v967 = vpop.f32.mrf.mxu0
    %968 = vdwg.mxu0
    %v969 = vadd.f32 %v896, %v966
    %v970 = vtanh.pop %v969
    %v971 = vmul.f32 %v970, 0.5
    %v972 = vadd.f32 %v971, 0.5
    %v973 = vsel %vm360, %v970, %v972
    %v974 = vmul.f32 %v973, %v882
    %976 = vrot.lane.b32.xlu0 %v973, 64
    %v977 = vpop.permute.xlu0 %976
    %v979 = vmul.f32 %v973, %v977
    %981 = vrot.lane.b32.xlu0 %v979, 32
    %v982 = vpop.permute.xlu0 %981
    %v984 = vadd.f32 %v974, %v982
    %v985 = vtanh.pop %v984
    %987 = vrot.lane.b32.xlu0 %v985, 64
    %v988 = vpop.permute.xlu0 %987
    %v990 = vmul.f32 %v973, %v988
    %992 = vrot.lane.b32.xlu0 %v990, 32
    %v993 = vpop.permute.xlu0 %992
    %s995 = scalar_lea.vmem [#allocation3], 12
    %996 = vst.msk [vmem:[%s995] sm:$0x3] %vm383, %v993
    %s997 = scalar_lea.vmem [#allocation2], 14
    %v998 = vld [vmem:[%s997] sm:$0x3]
    %v999 = vsel %vm281, %v993, 0
    %1001 = vmatprep.subr.mxu0 0.0
    %1002 = vmatpush1.msra.mxu0 0.0
    %1003 = vmatprep.subr.mxu0 0.0
    %1004 = vmatpush1.msra.mxu0 0.0
    %1005 = vmatprep.subr.mxu0 0.0
    %1006 = vmatpush1.msra.mxu0 0.0
    %1007 = vmatprep.subr.mxu0 0.0
    %1008 = vmatpush1.msra.mxu0 0.0
    %1009 = vmatprep.subr.mxu0 0.0
    %1010 = vmatpush1.msra.mxu0 0.0
    %1011 = vmatprep.subr.mxu0 0.0
    %1012 = vmatpush1.msra.mxu0 0.0
    %1013 = vmatprep.subr.mxu0 0.0
    %1014 = vmatpush1.msra.mxu0 0.0
    %1015 = vmatprep.subr.mxu0 0.0
    %1016 = vmatpush1.msra.mxu0 0.0
    %1017 = vmatprep.subr.mxu0 0.0
    %1018 = vmatpush1.msra.mxu0 0.0
    %1019 = vmatprep.subr.mxu0 0.0
    %1020 = vmatpush1.msra.mxu0 0.0
    %1021 = vmatprep.subr.mxu0 0.0
    %1022 = vmatpush1.msra.mxu0 0.0
    %1023 = vmatprep.subr.mxu0 0.0
    %1024 = vmatpush1.msra.mxu0 0.0
    %1025 = vmatprep.subr.mxu0 0.0
    %1026 = vmatpush1.msra.mxu0 %v274
    %1027 = vmatprep.subr.mxu0 0.0
    %1028 = vmatpush1.msra.mxu0 %v273
    %1029 = vmatprep.subr.mxu0 0.0
    %1030 = vmatpush1.msra.mxu0 %v272
    %1031 = vmatprep.subr.mxu0 0.0
    %1032 = vmatpush1.msra.mxu0 %v271
    %1033 = vmatprep.subr.mxu0 0.0
    %1034 = vmatpush2.msra.mxu0 0.0
    %1035 = vmatprep.subr.mxu0 0.0
    %1036 = vmatpush2.msra.mxu0 0.0
    %1037 = vmatprep.subr.mxu0 0.0
    %1038 = vmatpush2.msra.mxu0 0.0
    %1039 = vmatprep.subr.mxu0 0.0
    %1040 = vmatpush2.msra.mxu0 0.0
    %1041 = vmatprep.subr.mxu0 0.0
    %1042 = vmatpush2.msra.mxu0 0.0
    %1043 = vmatprep.subr.mxu0 0.0
    %1044 = vmatpush2.msra.mxu0 0.0
    %1045 = vmatprep.subr.mxu0 0.0
    %1046 = vmatpush2.msra.mxu0 0.0
    %1047 = vmatprep.subr.mxu0 0.0
    %1048 = vmatpush2.msra.mxu0 0.0
    %1049 = vmatprep.subr.mxu0 0.0
    %1050 = vmatpush2.msra.mxu0 0.0
    %1051 = vmatprep.subr.mxu0 0.0
    %1052 = vmatpush2.msra.mxu0 0.0
    %1053 = vmatprep.subr.mxu0 0.0
    %1054 = vmatpush2.msra.mxu0 0.0
    %1055 = vmatprep.subr.mxu0 0.0
    %1056 = vmatpush2.msra.mxu0 0.0
    %1057 = vmatprep.subr.mxu0 0.0
    %1058 = vmatpush2.msra.mxu0 0.0
    %1059 = vmatprep.subr.mxu0 0.0
    %1060 = vmatpush2.msra.mxu0 0.0
    %1061 = vmatprep.subr.mxu0 0.0
    %1062 = vmatpush2.msra.mxu0 0.0
    %1063 = vmatprep.subr.mxu0 0.0
    %1064 = vmatpush2.msra.mxu0 0.0
    %1065 = vmatprep.mubr.f32.mxu0 0.0
    %1066 = vmatmul.mubr.f32.gmra.mxu0 %v999
    %v1067 = vpop.f32.mrf.mxu0
    %v1068 = vadd.f32 0.0, %v1067
    %v1069 = vpop.f32.mrf.mxu0
    %1070 = vdwg.mxu0
    %v1071 = vadd.f32 %v998, %v1068
    %v1072 = vtanh.pop %v1071
    %v1073 = vmul.f32 %v1072, 0.5
    %v1074 = vadd.f32 %v1073, 0.5
    %v1075 = vsel %vm360, %v1072, %v1074
    %v1076 = vmul.f32 %v1075, %v984
    %1078 = vrot.lane.b32.xlu0 %v1075, 64
    %v1079 = vpop.permute.xlu0 %1078
    %v1081 = vmul.f32 %v1075, %v1079
    %1083 = vrot.lane.b32.xlu0 %v1081, 32
    %v1084 = vpop.permute.xlu0 %1083
    %v1086 = vadd.f32 %v1076, %v1084
    %v1087 = vtanh.pop %v1086
    %1089 = vrot.lane.b32.xlu0 %v1087, 64
    %v1090 = vpop.permute.xlu0 %1089
    %v1092 = vmul.f32 %v1075, %v1090
    %1094 = vrot.lane.b32.xlu0 %v1092, 32
    %v1095 = vpop.permute.xlu0 %1094
    %s1097 = scalar_lea.vmem [#allocation3], 14
    %1098 = vst.msk [vmem:[%s1097] sm:$0x3] %vm383, %v1095
    %v1099 = vld [vmem:[#allocation3] sm:$0x3]
    %v1100 = vld [vmem:[#allocation3 + $0x2] sm:$0x3]
    %v1101 = vld [vmem:[#allocation3 + $0x4] sm:$0x3]
    %v1102 = vld [vmem:[#allocation3 + $0x6] sm:$0x3]
    %v1103 = vld [vmem:[#allocation3 + $0x8] sm:$0x3]
    %v1104 = vld [vmem:[#allocation3 + $0xa] sm:$0x3]
    %v1105 = vld [vmem:[#allocation3 + $0xc] sm:$0x3]
    %v1106 = vld [vmem:[#allocation3 + $0xe] sm:$0x3]
    %vm1107 = vcmask 130048
    %v1108 = vsel %vm1107, %v1099, %v1106
    %v1109 = vsel %vm1107, %v1100, %v1105
    %v1110 = vsel %vm1107, %v1101, %v1104
    %v1111 = vsel %vm1107, %v1102, %v1103
    %v1112 = vsel %vm1107, %v1103, %v1102
    %v1113 = vsel %vm1107, %v1104, %v1101
    %v1114 = vsel %vm1107, %v1105, %v1100
    %v1115 = vsel %vm1107, %v1106, %v1099
    %v1116 = vsel %vm383, %v1108, 0.0
    %1117 = vadd.xlane.f32.xlu0 %v1116
    %v1118 = vpop.xlane.xlu0 %1117
    %v1119 = vsel %vm383, %v1109, 0.0
    %1120 = vadd.xlane.f32.xlu0 %v1119
    %v1121 = vpop.xlane.xlu0 %1120
    %v1122 = vsel %vm383, %v1110, 0.0
    %1123 = vadd.xlane.f32.xlu0 %v1122
    %v1124 = vpop.xlane.xlu0 %1123
    %v1125 = vsel %vm383, %v1111, 0.0
    %1126 = vadd.xlane.f32.xlu0 %v1125
    %v1127 = vpop.xlane.xlu0 %1126
    %v1128 = vsel %vm383, %v1112, 0.0
    %1129 = vadd.xlane.f32.xlu0 %v1128
    %v1130 = vpop.xlane.xlu0 %1129
    %v1131 = vsel %vm383, %v1113, 0.0
    %1132 = vadd.xlane.f32.xlu0 %v1131
    %v1133 = vpop.xlane.xlu0 %1132
    %v1134 = vsel %vm383, %v1114, 0.0
    %1135 = vadd.xlane.f32.xlu0 %v1134
    %v1136 = vpop.xlane.xlu0 %1135
    %v1137 = vsel %vm383, %v1115, 0.0
    %1138 = vadd.xlane.f32.xlu0 %v1137
    %v1139 = vpop.xlane.xlu0 %1138
    %v1140 = vrcp.pop 32.0
    %v1141 = vmul.f32 %v1118, %v1140
    %v1142 = vmul.f32 %v1121, %v1140
    %v1143 = vmul.f32 %v1124, %v1140
    %v1144 = vmul.f32 %v1127, %v1140
    %v1145 = vmul.f32 %v1130, %v1140
    %v1146 = vmul.f32 %v1133, %v1140
    %v1147 = vmul.f32 %v1136, %v1140
    %v1148 = vmul.f32 %v1139, %v1140
    %v1149 = vsub.f32 %v1108, %v1141
    %v1150 = vsub.f32 %v1109, %v1142
    %v1151 = vsub.f32 %v1110, %v1143
    %v1152 = vsub.f32 %v1111, %v1144
    %v1153 = vsub.f32 %v1112, %v1145
    %v1154 = vsub.f32 %v1113, %v1146
    %v1155 = vsub.f32 %v1114, %v1147
    %v1156 = vsub.f32 %v1115, %v1148
    %v1157 = vmul.f32 %v1149, %v1149
    %v1158 = vmul.f32 %v1150, %v1150
    %v1159 = vmul.f32 %v1151, %v1151
    %v1160 = vmul.f32 %v1152, %v1152
    %v1161 = vmul.f32 %v1153, %v1153
    %v1162 = vmul.f32 %v1154, %v1154
    %v1163 = vmul.f32 %v1155, %v1155
    %v1164 = vmul.f32 %v1156, %v1156
    %v1165 = vsel %vm383, %v1157, 0.0
    %1166 = vadd.xlane.f32.xlu0 %v1165
    %v1167 = vpop.xlane.xlu0 %1166
    %v1168 = vsel %vm383, %v1158, 0.0
    %1169 = vadd.xlane.f32.xlu0 %v1168
    %v1170 = vpop.xlane.xlu0 %1169
    %v1171 = vsel %vm383, %v1159, 0.0
    %1172 = vadd.xlane.f32.xlu0 %v1171
    %v1173 = vpop.xlane.xlu0 %1172
    %v1174 = vsel %vm383, %v1160, 0.0
    %1175 = vadd.xlane.f32.xlu0 %v1174
    %v1176 = vpop.xlane.xlu0 %1175
    %v1177 = vsel %vm383, %v1161, 0.0
    %1178 = vadd.xlane.f32.xlu0 %v1177
    %v1179 = vpop.xlane.xlu0 %1178
    %v1180 = vsel %vm383, %v1162, 0.0
    %1181 = vadd.xlane.f32.xlu0 %v1180
    %v1182 = vpop.xlane.xlu0 %1181
    %v1183 = vsel %vm383, %v1163, 0.0
    %1184 = vadd.xlane.f32.xlu0 %v1183
    %v1185 = vpop.xlane.xlu0 %1184
    %v1186 = vsel %vm383, %v1164, 0.0
    %1187 = vadd.xlane.f32.xlu0 %v1186
    %v1188 = vpop.xlane.xlu0 %1187
    %v1189 = vmul.f32 %v1167, %v1140
    %v1190 = vmul.f32 %v1170, %v1140
    %v1191 = vmul.f32 %v1173, %v1140
    %v1192 = vmul.f32 %v1176, %v1140
    %v1193 = vmul.f32 %v1179, %v1140
    %v1194 = vmul.f32 %v1182, %v1140
    %v1195 = vmul.f32 %v1185, %v1140
    %v1196 = vmul.f32 %v1188, %v1140
    %v1197 = vadd.f32 %v1189, 1e-05
    %v1198 = vadd.f32 %v1190, 1e-05
    %v1199 = vadd.f32 %v1191, 1e-05
    %v1200 = vadd.f32 %v1192, 1e-05
    %v1201 = vadd.f32 %v1193, 1e-05
    %v1202 = vadd.f32 %v1194, 1e-05
    %v1203 = vadd.f32 %v1195, 1e-05
    %v1204 = vadd.f32 %v1196, 1e-05
    %v1205 = vrsqrt.pop %v1197
    %v1206 = vrsqrt.pop %v1198
    %v1207 = vrsqrt.pop %v1199
    %v1208 = vrsqrt.pop %v1200
    %v1209 = vrsqrt.pop %v1201
    %v1210 = vrsqrt.pop %v1202
    %v1211 = vrsqrt.pop %v1203
    %v1212 = vrsqrt.pop %v1204
    %v1213 = vmul.f32 %v1149, %v1205
    %v1214 = vmul.f32 %v1150, %v1206
    %v1215 = vmul.f32 %v1151, %v1207
    %v1216 = vmul.f32 %v1152, %v1208
    %v1217 = vmul.f32 %v1153, %v1209
    %v1218 = vmul.f32 %v1154, %v1210
    %v1219 = vmul.f32 %v1155, %v1211
    %v1220 = vmul.f32 %v1156, %v1212
    %v1221 = vld [vmem:[%s4] sm:$0xff]
    %v1222 = vld [vmem:[%s4 + $0x8] sm:$0xff]
    %v1223 = vld [vmem:[%s4 + $0x10] sm:$0xff]
    %v1224 = vld [vmem:[%s4 + $0x18] sm:$0xff]
    %v1225 = vld [vmem:[%s5] sm:$0x1]
    %v1227 = vlaneseq
    %v1228 = vshrl.u32 %v1227, 7
    %v1229 = vsub.s32 0, %v1228
    %v1230 = vrot.slane %v1225, %v1229
    %v1240 = vcombine.low %v1213, %v1214
    %v1241 = vcombine.low %v1215, %v1216
    %v1243 = vunpack.c.l.s4 1983009808
    %v1244 = vunpack.c.0.s8 %v1243
    %v1245 = vlaneseq
    %v1246 = vshrl.u32 %v1245, 7
    %v1247 = vsub.s32 %v1244, %v1246
    %v1248 = vrot.slane %v1240, %v1247
    %v1250 = vunpack.c.l.s4 1983009808
    %v1251 = vunpack.c.0.s8 %v1250
    %v1252 = vlaneseq
    %v1253 = vshrl.u32 %v1252, 7
    %v1254 = vsub.s32 %v1251, %v1253
    %v1255 = vrot.slane %v1241, %v1254
    %v1256 = vcombine.low %v1248, %v1255
    %v1257 = vcombine.low %v1217, %v1218
    %v1258 = vcombine.low %v1219, %v1220
    %v1260 = vunpack.c.l.s4 1983009808
    %v1261 = vunpack.c.0.s8 %v1260
    %v1262 = vlaneseq
    %v1263 = vshrl.u32 %v1262, 7
    %v1264 = vsub.s32 %v1261, %v1263
    %v1265 = vrot.slane %v1257, %v1264
    %v1267 = vunpack.c.l.s4 1983009808
    %v1268 = vunpack.c.0.s8 %v1267
    %v1269 = vlaneseq
    %v1270 = vshrl.u32 %v1269, 7
    %v1271 = vsub.s32 %v1268, %v1270
    %v1272 = vrot.slane %v1258, %v1271
    %v1273 = vcombine.low %v1265, %v1272
    %v1274 = vsel %vm281, %v1256, 0
    %v1276 = vsel %vm281, %v1273, 0
    %1278 = vmatprep.subr.mxu0 0.0
    %1279 = vmatpush1.msra.mxu0 0.0
    %1280 = vmatprep.subr.mxu0 0.0
    %1281 = vmatpush1.msra.mxu0 0.0
    %1282 = vmatprep.subr.mxu0 0.0
    %1283 = vmatpush1.msra.mxu0 0.0
    %1284 = vmatprep.subr.mxu0 0.0
    %1285 = vmatpush1.msra.mxu0 0.0
    %1286 = vmatprep.subr.mxu0 0.0
    %1287 = vmatpush1.msra.mxu0 0.0
    %1288 = vmatprep.subr.mxu0 0.0
    %1289 = vmatpush1.msra.mxu0 0.0
    %1290 = vmatprep.subr.mxu0 0.0
    %1291 = vmatpush1.msra.mxu0 0.0
    %1292 = vmatprep.subr.mxu0 0.0
    %1293 = vmatpush1.msra.mxu0 0.0
    %1294 = vmatprep.subr.mxu0 0.0
    %1295 = vmatpush1.msra.mxu0 0.0
    %1296 = vmatprep.subr.mxu0 0.0
    %1297 = vmatpush1.msra.mxu0 0.0
    %1298 = vmatprep.subr.mxu0 0.0
    %1299 = vmatpush1.msra.mxu0 0.0
    %1300 = vmatprep.subr.mxu0 0.0
    %1301 = vmatpush1.msra.mxu0 0.0
    %1302 = vmatprep.subr.mxu0 0.0
    %1303 = vmatpush1.msra.mxu0 %v1224
    %1304 = vmatprep.subr.mxu0 0.0
    %1305 = vmatpush1.msra.mxu0 %v1223
    %1306 = vmatprep.subr.mxu0 0.0
    %1307 = vmatpush1.msra.mxu0 %v1222
    %1308 = vmatprep.subr.mxu0 0.0
    %1309 = vmatpush1.msra.mxu0 %v1221
    %1310 = vmatprep.subr.mxu0 0.0
    %1311 = vmatpush2.msra.mxu0 0.0
    %1312 = vmatprep.subr.mxu0 0.0
    %1313 = vmatpush2.msra.mxu0 0.0
    %1314 = vmatprep.subr.mxu0 0.0
    %1315 = vmatpush2.msra.mxu0 0.0
    %1316 = vmatprep.subr.mxu0 0.0
    %1317 = vmatpush2.msra.mxu0 0.0
    %1318 = vmatprep.subr.mxu0 0.0
    %1319 = vmatpush2.msra.mxu0 0.0
    %1320 = vmatprep.subr.mxu0 0.0
    %1321 = vmatpush2.msra.mxu0 0.0
    %1322 = vmatprep.subr.mxu0 0.0
    %1323 = vmatpush2.msra.mxu0 0.0
    %1324 = vmatprep.subr.mxu0 0.0
    %1325 = vmatpush2.msra.mxu0 0.0
    %1326 = vmatprep.subr.mxu0 0.0
    %1327 = vmatpush2.msra.mxu0 0.0
    %1328 = vmatprep.subr.mxu0 0.0
    %1329 = vmatpush2.msra.mxu0 0.0
    %1330 = vmatprep.subr.mxu0 0.0
    %1331 = vmatpush2.msra.mxu0 0.0
    %1332 = vmatprep.subr.mxu0 0.0
    %1333 = vmatpush2.msra.mxu0 0.0
    %1334 = vmatprep.subr.mxu0 0.0
    %1335 = vmatpush2.msra.mxu0 0.0
    %1336 = vmatprep.subr.mxu0 0.0
    %1337 = vmatpush2.msra.mxu0 0.0
    %1338 = vmatprep.subr.mxu0 0.0
    %1339 = vmatpush2.msra.mxu0 0.0
    %1340 = vmatprep.subr.mxu0 0.0
    %1341 = vmatpush2.msra.mxu0 0.0
    %1342 = vmatprep.mubr.f32.mxu0 0.0
    %1343 = vmatmul.mubr.f32.gmra.mxu0 %v1274
    %v1344 = vpop.f32.mrf.mxu0
    %v1345 = vadd.f32 %v1230, %v1344
    %v1346 = vpop.f32.mrf.mxu0
    %1347 = vmatprep.mubr.f32.mxu0 0.0
    %1348 = vmatmul.mubr.f32.gmra.mxu0 %v1276
    %v1349 = vpop.f32.mrf.mxu0
    %v1350 = vadd.f32 %v1230, %v1349
    %v1351 = vpop.f32.mrf.mxu0
    %1352 = vdwg.mxu0
    %v1355 = vcombine.high %v1345, %v1345
    %v1357 = vunpack.c.l.s4 1983009808
    %v1358 = vunpack.c.0.s8 %v1357
    %v1359 = vlaneseq
    %v1360 = vshrl.u32 %v1359, 7
    %v1361 = vsub.s32 %v1358, %v1360
    %v1362 = vrot.slane %v1345, %v1361
    %v1364 = vunpack.c.l.s4 1983009808
    %v1365 = vunpack.c.0.s8 %v1364
    %v1366 = vlaneseq
    %v1367 = vshrl.u32 %v1366, 7
    %v1368 = vsub.s32 %v1365, %v1367
    %v1369 = vrot.slane %v1355, %v1368
    %v1370 = vcombine.high %v1362, %v1362
    %v1371 = vcombine.high %v1369, %v1369
    %v1372 = vcombine.high %v1350, %v1350
    %v1374 = vunpack.c.l.s4 1983009808
    %v1375 = vunpack.c.0.s8 %v1374
    %v1376 = vlaneseq
    %v1377 = vshrl.u32 %v1376, 7
    %v1378 = vsub.s32 %v1375, %v1377
    %v1379 = vrot.slane %v1350, %v1378
    %v1381 = vunpack.c.l.s4 1983009808
    %v1382 = vunpack.c.0.s8 %v1381
    %v1383 = vlaneseq
    %v1384 = vshrl.u32 %v1383, 7
    %v1385 = vsub.s32 %v1382, %v1384
    %v1386 = vrot.slane %v1372, %v1385
    %v1387 = vcombine.high %v1379, %v1379
    %v1388 = vcombine.high %v1386, %v1386
    %vm1397 = vcmask 123904
    %1398 = vst.msk [vmem:[#allocation7] sm:$0x3] %vm1397, %v1362
    %1399 = vst.msk [vmem:[#allocation7 + $0x2] sm:$0x3] %vm1397, %v1370
    %1400 = vst.msk [vmem:[#allocation7 + $0x4] sm:$0x3] %vm1397, %v1369
    %1401 = vst.msk [vmem:[#allocation7 + $0x6] sm:$0x3] %vm1397, %v1371
    %1402 = vst.msk [vmem:[#allocation7 + $0x8] sm:$0x3] %vm1397, %v1379
    %1403 = vst.msk [vmem:[#allocation7 + $0xa] sm:$0x3] %vm1397, %v1387
    %1404 = vst.msk [vmem:[#allocation7 + $0xc] sm:$0x3] %vm1397, %v1386
    %1405 = vst.msk [vmem:[#allocation7 + $0xe] sm:$0x3] %vm1397, %v1388
    // Predicated region
    $region30: #{tpu_custom_call.1} parent=1 // pred_check
      _
    $region31: #{tpu_custom_call.1} parent=1 // pred_check_branch
      %1407 = sbr.rel (0) target = $region33
    $region32: #{tpu_custom_call.1} parent=1 // pred_region
      %s1409 = ssub.s32 256, 256
      %1410 = vsyncadd [#allocation6], %s1409
      %s1411 = sshll.u32 [#allocation7], 4
      %s1412 = int_to_ptr.vmem [resolvable:$true] %s1411
      %1417 = dma.vmem_to_hbm [thread:$0]  %s1412, 256, %s6, [#allocation6], 32, 32, 2
    $region33: #{tpu_custom_call.1} parent=1 // pred_fallthru
      _
    // Predicated region
    $region34: #{tpu_custom_call.1} parent=1 // pred_check
      _
    $region35: #{tpu_custom_call.1} parent=1 // pred_check_branch
      %1419 = sbr.rel (0) target = $region37
    $region36: #{tpu_custom_call.1} parent=1 // pred_region
      %1420 = dma.done [#allocation6], 256
    $region37: #{tpu_custom_call.1} parent=1 // pred_fallthru
      _
    %1421 = vsyncpa [#allocation5], 1
    %1422 = vsyncpa [#allocation6], 1

</llo_original>
